<compile_context>
chip_gen: v7x
topology: tpu7x:2x2x1
jax: 0.10.0
libtpu: 0.0.40
codegen_flags: <defaults>
</compile_context>

<pallas_src>
import functools

import jax
import jax.numpy as jnp
import numpy as np
from jax.experimental import pallas as pl
from jax.experimental.pallas import tpu as pltpu

HIGHEST = jax.lax.Precision.HIGHEST


def _round_up(x, m):
    return -(-x // m) * m


def _round_down(x, m):
    return (x // m) * m


@functools.lru_cache(maxsize=None)
def _vmem_limit_bytes():
    """Explicit scoped-VMEM limit: ~75% of physical capacity (the default scoped
    limit is only 16-32 MiB and would reject larger, DMA-efficient tiles)."""
    try:
        cap = getattr(pltpu.get_tpu_info(), "vmem_capacity_bytes", None)
    except Exception:
        cap = None
    if not cap:
        cap = 64 << 20          # conservative fallback (v7x physical VMEM)
    return int(cap) * 3 // 4


# --------------------------------------------------------------------------
# Kernel 1: fused center->point squared distances + k-smallest selection.
# --------------------------------------------------------------------------
def _knn_dist_kernel(sp_ref, pt_ref, od_ref, oi_ref, bd_ref, bi_ref,
                     *, k, n_valid, n_padded):
    ni = pl.program_id(2)

    @pl.when(ni == 0)
    def _():
        bd_ref[...] = jnp.full_like(bd_ref, jnp.inf)   # lanes >= k stay +inf forever
        bi_ref[...] = jnp.zeros_like(bi_ref)

    sp = sp_ref[0]                                     # (tile_s, 3)
    pt = pt_ref[0]                                     # (3, tile_n) lane-dense
    tile_s = sp.shape[0]
    tile_n = pt.shape[1]

    # exact (a-b)^2 accumulated per coordinate (f32, VPU); faithful to torch,
    # no Gram-form cancellation and no precision=HIGHEST MXU passes.
    d = jnp.zeros((tile_s, tile_n), jnp.float32)
    for dim in range(sp.shape[1]):
        diff = sp[:, dim:dim + 1] - pt[dim:dim + 1, :]
        d = d + diff * diff

    lane = jax.lax.broadcasted_iota(jnp.int32, (tile_s, tile_n), 1) + ni * tile_n
    if n_padded:
        d = jnp.where(lane < n_valid, d, jnp.inf)      # mask padded points
    gidx = lane.astype(jnp.float32)                    # f32 index carrier (< 2^24)

    # merge this tile with the running best-k (aligned 128-lane scratch -> the
    # concat does not lane-shift the big tile).
    cand_d = jnp.concatenate([bd_ref[...], d], axis=1)
    cand_i = jnp.concatenate([bi_ref[...], gidx], axis=1)

    picked_d, picked_i = [], []
    for _ in range(k):                                 # k small: unrolled, 2 reduces/pass
        m = jnp.min(cand_d, axis=1, keepdims=True)
        sel = jnp.min(jnp.where(cand_d == m, cand_i, jnp.float32(3e38)),
                      axis=1, keepdims=True)           # lowest index among ties
        hit = jnp.logical_and(cand_d == m, cand_i == sel)
        cand_d = jnp.where(hit, jnp.inf, cand_d)
        picked_d.append(m)
        picked_i.append(sel)

    bd_ref[:, :k] = jnp.concatenate(picked_d, axis=1)  # sorted ascending
    bi_ref[:, :k] = jnp.concatenate(picked_i, axis=1)

    @pl.when(ni == pl.num_programs(2) - 1)
    def _():
        od_ref[0] = bd_ref[:, :k]
        oi_ref[0] = bi_ref[:, :k].astype(jnp.int32)


def knn_dist_topk(sampled_pos, pos, *, k, tile_s=128, tile_n=512):
    """k smallest squared distances (sorted ascending) + indices, per center."""
    B, S, D = sampled_pos.shape
    _, N, _ = pos.shape
    assert k <= 128 and k <= N

    tile_s = min(tile_s, _round_up(S, 8))
    S_pad = _round_up(S, tile_s)
    tile_n = min(tile_n, _round_up(N, 128))
    N_pad = _round_up(N, tile_n)

    if S_pad != S:
        sampled_pos = jnp.pad(sampled_pos, ((0, 0), (0, S_pad - S), (0, 0)))
    pos_t = jnp.swapaxes(pos, 1, 2)                    # (B, 3, N): lane-dense points
    if N_pad != N:
        pos_t = jnp.pad(pos_t, ((0, 0), (0, 0), (0, N_pad - N)))

    kern = functools.partial(_knn_dist_kernel, k=k, n_valid=N,
                             n_padded=(N_pad != N))
    d, i = pl.pallas_call(
        kern,
        out_shape=(jax.ShapeDtypeStruct((B, S_pad, k), jnp.float32),
                   jax.ShapeDtypeStruct((B, S_pad, k), jnp.int32)),
        grid=(B, S_pad // tile_s, N_pad // tile_n),
        in_specs=[pl.BlockSpec((1, tile_s, D), lambda b, s, n: (b, s, 0)),
                  pl.BlockSpec((1, D, tile_n), lambda b, s, n: (b, 0, n))],
        out_specs=(pl.BlockSpec((1, tile_s, k), lambda b, s, n: (b, s, 0)),
                   pl.BlockSpec((1, tile_s, k), lambda b, s, n: (b, s, 0))),
        scratch_shapes=[pltpu.VMEM((tile_s, 128), jnp.float32),
                        pltpu.VMEM((tile_s, 128), jnp.float32)],
        compiler_params=pltpu.CompilerParams(
            dimension_semantics=("parallel", "parallel", "arbitrary"),
            vmem_limit_bytes=_vmem_limit_bytes()),
    )(sampled_pos, pos_t)
    if S_pad != S:
        d, i = d[:, :S], i[:, :S]
    return d, i


# --------------------------------------------------------------------------
# Kernel 2: fused 2-layer MLP (folded conv+bn) + (r-masked) max over K neighbors
# --------------------------------------------------------------------------
def _feat_mlp_max_kernel(*refs, k_true, last_act, pack, r, k_padded):
    if r is not None:
        feat_ref, dist_ref, w1_ref, b1_ref, w2_ref, b2_ref, o_ref, acc_ref = refs
    else:
        feat_ref, w1_ref, b1_ref, w2_ref, b2_ref, o_ref, acc_ref = refs
    kt = pl.program_id(1)

    @pl.when(kt == 0)
    def _():
        acc_ref[...] = jnp.full_like(acc_ref, -jnp.inf)

    tile_p, tile_k, cin = feat_ref.shape
    # sublane-merge reshape (cin stays the lane dim) -> 2-D MXU operand
    e = feat_ref[...].reshape(tile_p * tile_k, cin)
    # bf16 features/w1, f32 accumulate (default-precision MXU path)
    h = jnp.dot(e, w1_ref[...], preferred_element_type=jnp.float32) + b1_ref[...]
    h = jnp.maximum(h, 0.0)
    y = jnp.dot(h, w2_ref[...], preferred_element_type=jnp.float32) + b2_ref[...]
    if last_act:
        y = jnp.maximum(y, 0.0)
    dout = y.shape[-1]
    y3 = y.reshape(tile_p, tile_k, dout)
    if r is not None:
        # max_pooling_with_r: add -1e8 where neighbor distance > r
        ind = jnp.where(dist_ref[...] > r, jnp.float32(-1e8), jnp.float32(0.0))
        y3 = y3 + ind[:, :, None]
    if k_padded:
        jpos = jax.lax.broadcasted_iota(jnp.int32, y3.shape, 1) + kt * tile_k
        y3 = jnp.where(jpos < k_true, y3, -jnp.inf)    # padded neighbors never win
    acc_ref[...] = jnp.maximum(acc_ref[...], jnp.max(y3, axis=1))

    @pl.when(kt == pl.num_programs(1) - 1)
    def _():
        m = acc_ref[...]
        if pack > 1:
            # lane-dense packed output: (tile_p/pack, pack*dout) with pack*dout == 128
            o_ref[...] = m.reshape(tile_p // pack, pack * dout)
        else:
            o_ref[...] = m


def feat_mlp_max(feat, w1, b1, w2, b2, *, dist=None, r=None, last_act=False,
                 tile_p_target=512, tile_k_target=512):
    """feat: (P, K, Cin) grouped features; returns (P, Dout) pooled over K."""
    P, K, Cin = feat.shape
    H = w1.shape[1]
    Dout = w2.shape[1]
    use_r = (r is not None) and (dist is not None)

    # lane-dense output packing: pack rows so the stored last dim is 128 lanes
    pack = 128 // Dout if (Dout <= 128 and 128 % Dout == 0) else 1
    if P < 8 * pack:                                   # tiny problems: keep simple
        pack = 1
    granule = 8 * pack

    # K (neighbor) tiling: single tile for small K (kNN path), tiled running-max
    # for the global-pool path where K == N.
    if K <= tile_k_target:
        tile_k, K_pad = K, K
    else:
        tile_k = tile_k_target                         # multiple of 8 and 128
        K_pad = _round_up(K, tile_k)
    k_padded = K_pad != K

    # P tiling: bounded by a per-buffer VMEM budget, rounded to the packing
    # granule; shrink until the parallel grid has >=4 steps (v7x: 2 TCs).
    P_pad = _round_up(P, granule)
    budget = 4 << 20
    bytes_per_row = tile_k * Cin * 2                   # bf16 features
    tile_p = max(granule, min(_round_down(budget // bytes_per_row, granule),
                              _round_up(tile_p_target, granule), P_pad))
    while P_pad // tile_p < 4 and tile_p > granule:
        tile_p = max(granule, _round_down(tile_p // 2, granule))
    P_pad = _round_up(P, tile_p)

    if P_pad != P or K_pad != K:
        feat = jnp.pad(feat, ((0, P_pad - P), (0, K_pad - K), (0, 0)))
        if use_r:
            dist = jnp.pad(dist, ((0, P_pad - P), (0, K_pad - K)))

    feat = feat.astype(jnp.bfloat16)                   # halves HBM/VMEM traffic
    w1 = w1.astype(jnp.bfloat16)

    grid = (P_pad // tile_p, K_pad // tile_k)
    kern = functools.partial(_feat_mlp_max_kernel, k_true=K, last_act=last_act,
                             pack=pack, r=(float(r) if use_r else None),
                             k_padded=k_padded)

    in_specs = [pl.BlockSpec((tile_p, tile_k, Cin), lambda i, kt: (i, kt, 0))]
    args = [feat]
    if use_r:
        # (tile_p, tile_k) mask side input (not lane-padded (rows, 1))
        in_specs.append(pl.BlockSpec((tile_p, tile_k), lambda i, kt: (i, kt)))
        args.append(dist)
    # TODO(synk): weight blocks could be single-buffered (pipeline_mode=Buffered(1));
    # they are tiny here so double-buffering costs ~nothing.
    in_specs += [
        pl.BlockSpec((Cin, H), lambda i, kt: (0, 0)),
        pl.BlockSpec((1, H), lambda i, kt: (0, 0)),
        pl.BlockSpec((H, Dout), lambda i, kt: (0, 0)),
        pl.BlockSpec((1, Dout), lambda i, kt: (0, 0)),
    ]
    args += [w1, b1, w2, b2]

    if pack > 1:
        out_shape = jax.ShapeDtypeStruct((P_pad // pack, pack * Dout), jnp.float32)
        out_spec = pl.BlockSpec((tile_p // pack, pack * Dout), lambda i, kt: (i, 0))
    else:
        out_shape = jax.ShapeDtypeStruct((P_pad, Dout), jnp.float32)
        out_spec = pl.BlockSpec((tile_p, Dout), lambda i, kt: (i, 0))

    out = pl.pallas_call(
        kern,
        out_shape=out_shape,
        grid=grid,
        in_specs=in_specs,
        out_specs=out_spec,
        scratch_shapes=[pltpu.VMEM((tile_p, Dout), jnp.float32)],
        compiler_params=pltpu.CompilerParams(
            dimension_semantics=("parallel", "arbitrary"),
            vmem_limit_bytes=_vmem_limit_bytes()),
    )(*args)
    return out.reshape(P_pad, Dout)[:P]                # row-major: free reshape


# --------------------------------------------------------------------------
# Parameter init (deterministic, synthetic) + eval-mode BatchNorm folding
# --------------------------------------------------------------------------
def init_raw_params(key, cin, cout):
    ks = jax.random.split(key, 12)
    p = {}
    # layer 1: Conv2d(cin -> cout, 1) + BN(cout)
    p["w1"] = 0.1 * jax.random.normal(ks[0], (cout, cin), jnp.float32)
    p["b1"] = 0.1 * jax.random.normal(ks[1], (cout,), jnp.float32)
    p["g1"] = 0.5 + jax.random.uniform(ks[2], (cout,), jnp.float32)
    p["be1"] = 0.1 * jax.random.normal(ks[3], (cout,), jnp.float32)
    p["m1"] = 0.1 * jax.random.normal(ks[4], (cout,), jnp.float32)
    p["v1"] = 0.5 + jax.random.uniform(ks[5], (cout,), jnp.float32)
    # layer 2: Conv2d(cout -> cout, 1) + BN(cout)
    p["w2"] = 0.1 * jax.random.normal(ks[6], (cout, cout), jnp.float32)
    p["b2"] = 0.1 * jax.random.normal(ks[7], (cout,), jnp.float32)
    p["g2"] = 0.5 + jax.random.uniform(ks[8], (cout,), jnp.float32)
    p["be2"] = 0.1 * jax.random.normal(ks[9], (cout,), jnp.float32)
    p["m2"] = 0.1 * jax.random.normal(ks[10], (cout,), jnp.float32)
    p["v2"] = 0.5 + jax.random.uniform(ks[11], (cout,), jnp.float32)
    return p


def fold_conv_bn(w, b, gamma, beta, mean, var, eps=1e-5):
    scale = gamma / jnp.sqrt(var + eps)
    w_eff = (w * scale[:, None]).T                     # (Cin, Cout)
    b_eff = ((b - mean) * scale + beta)[None, :]       # (1, Cout)
    return w_eff, b_eff


def fold_params(p, eps=1e-5):
    w1, b1 = fold_conv_bn(p["w1"], p["b1"], p["g1"], p["be1"], p["m1"], p["v1"], eps)
    w2, b2 = fold_conv_bn(p["w2"], p["b2"], p["g2"], p["be2"], p["m2"], p["v2"], eps)
    return {"w1": w1, "b1": b1, "w2": w2, "b2": b2}


# --------------------------------------------------------------------------
# PointppConv.forward
# --------------------------------------------------------------------------
def pointpp_conv_forward(folded, x, pos, *, k, sampled_idx=None, n_sampling=1,
                         r=None, last_act=False):
    """Returns (pooled_feat, nearest_k_idx, nearest_k_dist); the PyTorch module
    only returns pooled_feat (extras exposed for verification).
    NOTE: `relative_pos` of the PyTorch signature is unused in its body -> ignored."""
    bz, N, pd = pos.shape
    if x is not None and x.ndim > 3:
        x = jnp.squeeze(x, axis=-2)

    if n_sampling == 1:
        sampled_pos = jnp.zeros((bz, 1, pd), jnp.float32)
        gathered_pos = pos[:, None] - sampled_pos[:, :, None, :]        # (bz,1,N,3)
        gathered_x = x[:, None] if x is not None else None
        nearest_k_idx = nearest_k_dist = None
        pool_dist, r_eff = None, None                  # torch uses plain max here
    else:
        if sampled_idx is None:
            sampled_idx = jnp.arange(N * bz)
        # NOTE: indices address the batch-flattened pos view, exactly like torch.
        sampled_pos = pos.reshape(bz * N, pd)[sampled_idx].reshape(bz, -1, pd)
        nearest_k_dist, nearest_k_idx = knn_dist_topk(sampled_pos, pos, k=k)  # kernel 1
        gather = jax.vmap(lambda v, i: v[i])
        # TODO(synk): fuse this neighbor gather into the MLP kernel (scalar-prefetched
        # idx + in-VMEM row gather) to remove the K-x inflated HBM round trip.
        gathered_pos = gather(pos, nearest_k_idx) - sampled_pos[:, :, None, :]
        gathered_x = gather(x, nearest_k_idx) if x is not None else None
        pool_dist, r_eff = nearest_k_dist, r

    if x is None:
        gathered_feat = gathered_pos
    else:
        gathered_feat = jnp.concatenate([gathered_x, gathered_pos], axis=-1)

    B0, S0, K0, Cin = gathered_feat.shape
    flat = gathered_feat.reshape(B0 * S0, K0, Cin)
    dist_flat = pool_dist.reshape(B0 * S0, K0) if (r_eff is not None) else None

    pooled = feat_mlp_max(flat, folded["w1"], folded["b1"],
                          folded["w2"], folded["b2"],
                          dist=dist_flat, r=r_eff, last_act=last_act)    # kernel 2
    return pooled.reshape(B0, S0, -1), nearest_k_idx, nearest_k_dist


# --------------------------------------------------------------------------
# Pure-JAX reference (mirrors the PyTorch math: unfolded eval-mode BN, f32)
# --------------------------------------------------------------------------
def reference_mlp(raw, feat, *, last_act, eps=1e-5):
    def conv_bn(z, w, b, g, be, m, v, act):
        z = jnp.einsum("...c,oc->...o", z, w, precision=HIGHEST) + b
        z = (z - m) / jnp.sqrt(v + eps) * g + be
        return jnp.maximum(z, 0.0) if act else z
    h = conv_bn(feat, raw["w1"], raw["b1"], raw["g1"], raw["be1"], raw["m1"], raw["v1"], True)
    return conv_bn(h, raw["w2"], raw["b2"], raw["g2"], raw["be2"], raw["m2"], raw["v2"], last_act)


def max_pooling_with_r_ref(y, ppdist, r=None):
    if r is None:
        return jnp.max(y, axis=2)
    ind = jnp.where(ppdist > r, -1e8, 0.0)
    return jnp.max(y + ind[..., None], axis=2)


def reference_knn_forward(raw, x, pos, sampled_pos, idx, nearest_k_dist, *, r, last_act):
    gather = jax.vmap(lambda v, i: v[i])
    gx = gather(x, idx)
    gp = gather(pos, idx) - sampled_pos[:, :, None, :]
    feat = jnp.concatenate([gx, gp], axis=-1)
    y = reference_mlp(raw, feat, last_act=last_act)
    return max_pooling_with_r_ref(y, nearest_k_dist, r)


if __name__ == "__main__":
    bz, N = 2, 64
    Cx = 5
    in_feat_dim = Cx + 3                 # 8 (module: n_in = feature dim + pos dim)
    out_feat_dim = 16
    k = 8
    last_act = False

    key = jax.random.PRNGKey(0)
    kx, kp, kw = jax.random.split(key, 3)
    x = jax.random.normal(kx, (bz, N, Cx), jnp.float32)
    pos = jax.random.normal(kp, (bz, N, 3), jnp.float32)

    raw = init_raw_params(kw, in_feat_dim, out_feat_dim)
    folded = fold_params(raw)

    # bf16-feature MXU matmuls vs the f32/HIGHEST reference -> sized tolerance.
    TOL = dict(rtol=3e-2, atol=3e-2)

    # ---- Path A: n_sampling > 1 (kNN grouping), r-masked max pooling ----
    r = 1.5
    pooled, idx, nkd = pointpp_conv_forward(
        folded, x, pos, k=k, n_sampling=bz * N, r=r, last_act=last_act)
    pooled = jax.block_until_ready(pooled)

    # fused distance + top-k kernel vs exact plain-JAX reference values
    diff = pos[:, :, None, :] - pos[:, None, :, :]
    sdist_ref = jnp.sum(diff * diff, axis=-1)
    nkd_ref = -jax.lax.top_k(-sdist_ref, k)[0]
    np.testing.assert_allclose(np.asarray(nkd), np.asarray(nkd_ref),
                               rtol=1e-5, atol=1e-5)

    sampled_pos = pos                    # sampled_idx defaulted to arange -> all points
    ref_a = reference_knn_forward(raw, x, pos, sampled_pos, idx, nkd,
                                  r=r, last_act=last_act)
    np.testing.assert_allclose(np.asarray(pooled), np.asarray(ref_a), **TOL)

    # ---- Path A': same grouping path, r=None (plain max over neighbors) ----
    pooled0, idx0, nkd0 = pointpp_conv_forward(
        folded, x, pos, k=k, n_sampling=bz * N, r=None, last_act=last_act)
    pooled0 = jax.block_until_ready(pooled0)
    ref_a0 = reference_knn_forward(raw, x, pos, sampled_pos, idx0, nkd0,
                                   r=None, last_act=last_act)
    np.testing.assert_allclose(np.asarray(pooled0), np.asarray(ref_a0), **TOL)

    # ---- Path B: n_sampling == 1 (global max pooling over all N points) ----
    pooled_g, _, _ = pointpp_conv_forward(
        folded, x, pos, k=k, n_sampling=1, last_act=last_act)
    pooled_g = jax.block_until_ready(pooled_g)
    feat_g = jnp.concatenate([x[:, None], pos[:, None]], axis=-1)
    ref_b = jnp.max(reference_mlp(raw, feat_g, last_act=last_act), axis=2)
    np.testing.assert_allclose(np.asarray(pooled_g), np.asarray(ref_b), **TOL)

    print("KERNEL_OK")
</pallas_src>

<mosaic_0001>
module attributes {stable_mosaic.version = 11 : i64} {
  func.func @_knn_dist_kernel(%arg0: i32, %arg1: i32, %arg2: i32, %arg3: memref<1x64x3xf32, #tpu.memory_space<vmem>>, %arg4: memref<1x3x128xf32, #tpu.memory_space<vmem>>, %arg5: memref<1x64x8xf32, #tpu.memory_space<vmem>>, %arg6: memref<1x64x8xi32, #tpu.memory_space<vmem>>, %arg7: memref<64x128xf32, #tpu.memory_space<vmem>>, %arg8: memref<64x128xf32, #tpu.memory_space<vmem>>) attributes {dimension_semantics = [#tpu.dimension_semantics<parallel>, #tpu.dimension_semantics<parallel>, #tpu.dimension_semantics<arbitrary>], iteration_bounds = array<i64: 2, 1, 1>, scalar_prefetch = 0 : i64, scratch_operands = 2 : i64, tpu.core_type = #tpu.core_type<tc>, window_params = [{transform_indices = @transform_0, window_bounds = array<i64: 1, 64, 3>}, {transform_indices = @transform_1, window_bounds = array<i64: 1, 3, 128>}, {transform_indices = @transform_2, window_bounds = array<i64: 1, 64, 8>}, {transform_indices = @transform_3, window_bounds = array<i64: 1, 64, 8>}]} {
    %c0_i32 = arith.constant 0 : i32
    %0 = arith.cmpi eq, %arg2, %c0_i32 : i32
    %1 = arith.extui %0 : i1 to i32
    %c0_i32_0 = arith.constant 0 : i32
    %2 = arith.cmpi ne, %1, %c0_i32_0 : i32
    scf.if %2 {
      %cst_48 = arith.constant 0x7F800000 : f32
      %162 = vector.broadcast %cst_48 : f32 to vector<64x128xf32>
      %c0_49 = arith.constant 0 : index
      %c0_50 = arith.constant 0 : index
      %163 = vector.load %arg7[%c0_49, %c0_50] : memref<64x128xf32, #tpu.memory_space<vmem>>, vector<64x128xf32>
      tpu.vector_store %arg7[%c0_49, %c0_50], %162 {strides = array<i32>} : memref<64x128xf32, #tpu.memory_space<vmem>>, vector<64x128xf32>,
      %cst_51 = arith.constant 0.000000e+00 : f32
      %164 = vector.broadcast %cst_51 : f32 to vector<64x128xf32>
      %c0_52 = arith.constant 0 : index
      %c0_53 = arith.constant 0 : index
      %165 = vector.load %arg8[%c0_52, %c0_53] : memref<64x128xf32, #tpu.memory_space<vmem>>, vector<64x128xf32>
      tpu.vector_store %arg8[%c0_52, %c0_53], %164 {strides = array<i32>} : memref<64x128xf32, #tpu.memory_space<vmem>>, vector<64x128xf32>,
    } else {
    }
    %c0 = arith.constant 0 : index
    %c0_1 = arith.constant 0 : index
    %c0_2 = arith.constant 0 : index
    %3 = vector.load %arg3[%c0, %c0_1, %c0_2] : memref<1x64x3xf32, #tpu.memory_space<vmem>>, vector<1x64x3xf32>
    %4 = vector.shape_cast %3 : vector<1x64x3xf32> to vector<64x3xf32>
    %c0_3 = arith.constant 0 : index
    %c0_4 = arith.constant 0 : index
    %c0_5 = arith.constant 0 : index
    %5 = vector.load %arg4[%c0_3, %c0_4, %c0_5] : memref<1x3x128xf32, #tpu.memory_space<vmem>>, vector<1x3x128xf32>
    %6 = vector.shape_cast %5 : vector<1x3x128xf32> to vector<3x128xf32>
    %cst = arith.constant 0.000000e+00 : f32
    %7 = vector.broadcast %cst : f32 to vector<64x128xf32>
    %8 = vector.extract_strided_slice %4 {offsets = [0, 0], sizes = [64, 1], strides = [1, 1]} : vector<64x3xf32> to vector<64x1xf32>
    %9 = vector.extract_strided_slice %6 {offsets = [0, 0], sizes = [1, 128], strides = [1, 1]} : vector<3x128xf32> to vector<1x128xf32>
    %10 = vector.broadcast %8 : vector<64x1xf32> to vector<64x128xf32>
    %11 = vector.broadcast %9 : vector<1x128xf32> to vector<64x128xf32>
    %12 = arith.subf %10, %11 : vector<64x128xf32>
    %13 = arith.mulf %12, %12 : vector<64x128xf32>
    %14 = arith.addf %7, %13 : vector<64x128xf32>
    %15 = vector.extract_strided_slice %4 {offsets = [0, 1], sizes = [64, 1], strides = [1, 1]} : vector<64x3xf32> to vector<64x1xf32>
    %16 = vector.extract_strided_slice %6 {offsets = [1, 0], sizes = [1, 128], strides = [1, 1]} : vector<3x128xf32> to vector<1x128xf32>
    %17 = vector.broadcast %15 : vector<64x1xf32> to vector<64x128xf32>
    %18 = vector.broadcast %16 : vector<1x128xf32> to vector<64x128xf32>
    %19 = arith.subf %17, %18 : vector<64x128xf32>
    %20 = arith.mulf %19, %19 : vector<64x128xf32>
    %21 = arith.addf %14, %20 : vector<64x128xf32>
    %22 = vector.extract_strided_slice %4 {offsets = [0, 2], sizes = [64, 1], strides = [1, 1]} : vector<64x3xf32> to vector<64x1xf32>
    %23 = vector.extract_strided_slice %6 {offsets = [2, 0], sizes = [1, 128], strides = [1, 1]} : vector<3x128xf32> to vector<1x128xf32>
    %24 = vector.broadcast %22 : vector<64x1xf32> to vector<64x128xf32>
    %25 = vector.broadcast %23 : vector<1x128xf32> to vector<64x128xf32>
    %26 = arith.subf %24, %25 : vector<64x128xf32>
    %27 = arith.mulf %26, %26 : vector<64x128xf32>
    %28 = arith.addf %21, %27 : vector<64x128xf32>
    %29 = tpu.iota {dimensions = array<i32: 1>} : vector<64x128xi32>
    %c128_i32 = arith.constant 128 : i32
    %30 = arith.muli %arg2, %c128_i32 : i32
    %31 = vector.broadcast %30 : i32 to vector<64x128xi32>
    %32 = arith.addi %29, %31 : vector<64x128xi32>
    %c64_i32 = arith.constant 64 : i32
    %33 = vector.broadcast %c64_i32 : i32 to vector<64x128xi32>
    %34 = arith.cmpi slt, %32, %33 : vector<64x128xi32>
    %cst_6 = arith.constant 0x7F800000 : f32
    %35 = vector.broadcast %cst_6 : f32 to vector<64x128xf32>
    %36 = arith.select %34, %28, %35 : vector<64x128xi1>, vector<64x128xf32>
    %37 = arith.sitofp %32 : vector<64x128xi32> to vector<64x128xf32>
    %c0_7 = arith.constant 0 : index
    %c0_8 = arith.constant 0 : index
    %38 = vector.load %arg7[%c0_7, %c0_8] : memref<64x128xf32, #tpu.memory_space<vmem>>, vector<64x128xf32>
    %39 = tpu.concatenate %38, %36 in 1 : vector<64x128xf32>, vector<64x128xf32> -> vector<64x256xf32>
    %c0_9 = arith.constant 0 : index
    %c0_10 = arith.constant 0 : index
    %40 = vector.load %arg8[%c0_9, %c0_10] : memref<64x128xf32, #tpu.memory_space<vmem>>, vector<64x128xf32>
    %41 = tpu.concatenate %40, %37 in 1 : vector<64x128xf32>, vector<64x128xf32> -> vector<64x256xf32>
    %cst_11 = arith.constant dense<0x7F800000> : vector<64xf32>
    %42 = vector.multi_reduction <minimumf>, %39, %cst_11 [1] : vector<64x256xf32> to vector<64xf32>
    %43 = vector.shape_cast %42 : vector<64xf32> to vector<64x1xf32>
    %44 = vector.broadcast %43 : vector<64x1xf32> to vector<64x256xf32>
    %45 = arith.cmpf oeq, %39, %44 : vector<64x256xf32>
    %cst_12 = arith.constant 3.000000e+38 : f32
    %46 = vector.broadcast %cst_12 : f32 to vector<64x256xf32>
    %47 = arith.select %45, %41, %46 : vector<64x256xi1>, vector<64x256xf32>
    %cst_13 = arith.constant dense<0x7F800000> : vector<64xf32>
    %48 = vector.multi_reduction <minimumf>, %47, %cst_13 [1] : vector<64x256xf32> to vector<64xf32>
    %49 = vector.shape_cast %48 : vector<64xf32> to vector<64x1xf32>
    %50 = vector.broadcast %43 : vector<64x1xf32> to vector<64x256xf32>
    %51 = arith.cmpf oeq, %39, %50 : vector<64x256xf32>
    %52 = vector.broadcast %49 : vector<64x1xf32> to vector<64x256xf32>
    %53 = arith.cmpf oeq, %41, %52 : vector<64x256xf32>
    %54 = arith.andi %51, %53 : vector<64x256xi1>
    %cst_14 = arith.constant 0x7F800000 : f32
    %55 = vector.broadcast %cst_14 : f32 to vector<64x256xf32>
    %56 = arith.select %54, %55, %39 : vector<64x256xi1>, vector<64x256xf32>
    %cst_15 = arith.constant dense<0x7F800000> : vector<64xf32>
    %57 = vector.multi_reduction <minimumf>, %56, %cst_15 [1] : vector<64x256xf32> to vector<64xf32>
    %58 = vector.shape_cast %57 : vector<64xf32> to vector<64x1xf32>
    %59 = vector.broadcast %58 : vector<64x1xf32> to vector<64x256xf32>
    %60 = arith.cmpf oeq, %56, %59 : vector<64x256xf32>
    %cst_16 = arith.constant 3.000000e+38 : f32
    %61 = vector.broadcast %cst_16 : f32 to vector<64x256xf32>
    %62 = arith.select %60, %41, %61 : vector<64x256xi1>, vector<64x256xf32>
    %cst_17 = arith.constant dense<0x7F800000> : vector<64xf32>
    %63 = vector.multi_reduction <minimumf>, %62, %cst_17 [1] : vector<64x256xf32> to vector<64xf32>
    %64 = vector.shape_cast %63 : vector<64xf32> to vector<64x1xf32>
    %65 = vector.broadcast %58 : vector<64x1xf32> to vector<64x256xf32>
    %66 = arith.cmpf oeq, %56, %65 : vector<64x256xf32>
    %67 = vector.broadcast %64 : vector<64x1xf32> to vector<64x256xf32>
    %68 = arith.cmpf oeq, %41, %67 : vector<64x256xf32>
    %69 = arith.andi %66, %68 : vector<64x256xi1>
    %cst_18 = arith.constant 0x7F800000 : f32
    %70 = vector.broadcast %cst_18 : f32 to vector<64x256xf32>
    %71 = arith.select %69, %70, %56 : vector<64x256xi1>, vector<64x256xf32>
    %cst_19 = arith.constant dense<0x7F800000> : vector<64xf32>
    %72 = vector.multi_reduction <minimumf>, %71, %cst_19 [1] : vector<64x256xf32> to vector<64xf32>
    %73 = vector.shape_cast %72 : vector<64xf32> to vector<64x1xf32>
    %74 = vector.broadcast %73 : vector<64x1xf32> to vector<64x256xf32>
    %75 = arith.cmpf oeq, %71, %74 : vector<64x256xf32>
    %cst_20 = arith.constant 3.000000e+38 : f32
    %76 = vector.broadcast %cst_20 : f32 to vector<64x256xf32>
    %77 = arith.select %75, %41, %76 : vector<64x256xi1>, vector<64x256xf32>
    %cst_21 = arith.constant dense<0x7F800000> : vector<64xf32>
    %78 = vector.multi_reduction <minimumf>, %77, %cst_21 [1] : vector<64x256xf32> to vector<64xf32>
    %79 = vector.shape_cast %78 : vector<64xf32> to vector<64x1xf32>
    %80 = vector.broadcast %73 : vector<64x1xf32> to vector<64x256xf32>
    %81 = arith.cmpf oeq, %71, %80 : vector<64x256xf32>
    %82 = vector.broadcast %79 : vector<64x1xf32> to vector<64x256xf32>
    %83 = arith.cmpf oeq, %41, %82 : vector<64x256xf32>
    %84 = arith.andi %81, %83 : vector<64x256xi1>
    %cst_22 = arith.constant 0x7F800000 : f32
    %85 = vector.broadcast %cst_22 : f32 to vector<64x256xf32>
    %86 = arith.select %84, %85, %71 : vector<64x256xi1>, vector<64x256xf32>
    %cst_23 = arith.constant dense<0x7F800000> : vector<64xf32>
    %87 = vector.multi_reduction <minimumf>, %86, %cst_23 [1] : vector<64x256xf32> to vector<64xf32>
    %88 = vector.shape_cast %87 : vector<64xf32> to vector<64x1xf32>
    %89 = vector.broadcast %88 : vector<64x1xf32> to vector<64x256xf32>
    %90 = arith.cmpf oeq, %86, %89 : vector<64x256xf32>
    %cst_24 = arith.constant 3.000000e+38 : f32
    %91 = vector.broadcast %cst_24 : f32 to vector<64x256xf32>
    %92 = arith.select %90, %41, %91 : vector<64x256xi1>, vector<64x256xf32>
    %cst_25 = arith.constant dense<0x7F800000> : vector<64xf32>
    %93 = vector.multi_reduction <minimumf>, %92, %cst_25 [1] : vector<64x256xf32> to vector<64xf32>
    %94 = vector.shape_cast %93 : vector<64xf32> to vector<64x1xf32>
    %95 = vector.broadcast %88 : vector<64x1xf32> to vector<64x256xf32>
    %96 = arith.cmpf oeq, %86, %95 : vector<64x256xf32>
    %97 = vector.broadcast %94 : vector<64x1xf32> to vector<64x256xf32>
    %98 = arith.cmpf oeq, %41, %97 : vector<64x256xf32>
    %99 = arith.andi %96, %98 : vector<64x256xi1>
    %cst_26 = arith.constant 0x7F800000 : f32
    %100 = vector.broadcast %cst_26 : f32 to vector<64x256xf32>
    %101 = arith.select %99, %100, %86 : vector<64x256xi1>, vector<64x256xf32>
    %cst_27 = arith.constant dense<0x7F800000> : vector<64xf32>
    %102 = vector.multi_reduction <minimumf>, %101, %cst_27 [1] : vector<64x256xf32> to vector<64xf32>
    %103 = vector.shape_cast %102 : vector<64xf32> to vector<64x1xf32>
    %104 = vector.broadcast %103 : vector<64x1xf32> to vector<64x256xf32>
    %105 = arith.cmpf oeq, %101, %104 : vector<64x256xf32>
    %cst_28 = arith.constant 3.000000e+38 : f32
    %106 = vector.broadcast %cst_28 : f32 to vector<64x256xf32>
    %107 = arith.select %105, %41, %106 : vector<64x256xi1>, vector<64x256xf32>
    %cst_29 = arith.constant dense<0x7F800000> : vector<64xf32>
    %108 = vector.multi_reduction <minimumf>, %107, %cst_29 [1] : vector<64x256xf32> to vector<64xf32>
    %109 = vector.shape_cast %108 : vector<64xf32> to vector<64x1xf32>
    %110 = vector.broadcast %103 : vector<64x1xf32> to vector<64x256xf32>
    %111 = arith.cmpf oeq, %101, %110 : vector<64x256xf32>
    %112 = vector.broadcast %109 : vector<64x1xf32> to vector<64x256xf32>
    %113 = arith.cmpf oeq, %41, %112 : vector<64x256xf32>
    %114 = arith.andi %111, %113 : vector<64x256xi1>
    %cst_30 = arith.constant 0x7F800000 : f32
    %115 = vector.broadcast %cst_30 : f32 to vector<64x256xf32>
    %116 = arith.select %114, %115, %101 : vector<64x256xi1>, vector<64x256xf32>
    %cst_31 = arith.constant dense<0x7F800000> : vector<64xf32>
    %117 = vector.multi_reduction <minimumf>, %116, %cst_31 [1] : vector<64x256xf32> to vector<64xf32>
    %118 = vector.shape_cast %117 : vector<64xf32> to vector<64x1xf32>
    %119 = vector.broadcast %118 : vector<64x1xf32> to vector<64x256xf32>
    %120 = arith.cmpf oeq, %116, %119 : vector<64x256xf32>
    %cst_32 = arith.constant 3.000000e+38 : f32
    %121 = vector.broadcast %cst_32 : f32 to vector<64x256xf32>
    %122 = arith.select %120, %41, %121 : vector<64x256xi1>, vector<64x256xf32>
    %cst_33 = arith.constant dense<0x7F800000> : vector<64xf32>
    %123 = vector.multi_reduction <minimumf>, %122, %cst_33 [1] : vector<64x256xf32> to vector<64xf32>
    %124 = vector.shape_cast %123 : vector<64xf32> to vector<64x1xf32>
    %125 = vector.broadcast %118 : vector<64x1xf32> to vector<64x256xf32>
    %126 = arith.cmpf oeq, %116, %125 : vector<64x256xf32>
    %127 = vector.broadcast %124 : vector<64x1xf32> to vector<64x256xf32>
    %128 = arith.cmpf oeq, %41, %127 : vector<64x256xf32>
    %129 = arith.andi %126, %128 : vector<64x256xi1>
    %cst_34 = arith.constant 0x7F800000 : f32
    %130 = vector.broadcast %cst_34 : f32 to vector<64x256xf32>
    %131 = arith.select %129, %130, %116 : vector<64x256xi1>, vector<64x256xf32>
    %cst_35 = arith.constant dense<0x7F800000> : vector<64xf32>
    %132 = vector.multi_reduction <minimumf>, %131, %cst_35 [1] : vector<64x256xf32> to vector<64xf32>
    %133 = vector.shape_cast %132 : vector<64xf32> to vector<64x1xf32>
    %134 = vector.broadcast %133 : vector<64x1xf32> to vector<64x256xf32>
    %135 = arith.cmpf oeq, %131, %134 : vector<64x256xf32>
    %cst_36 = arith.constant 3.000000e+38 : f32
    %136 = vector.broadcast %cst_36 : f32 to vector<64x256xf32>
    %137 = arith.select %135, %41, %136 : vector<64x256xi1>, vector<64x256xf32>
    %cst_37 = arith.constant dense<0x7F800000> : vector<64xf32>
    %138 = vector.multi_reduction <minimumf>, %137, %cst_37 [1] : vector<64x256xf32> to vector<64xf32>
    %139 = vector.shape_cast %138 : vector<64xf32> to vector<64x1xf32>
    %140 = vector.broadcast %133 : vector<64x1xf32> to vector<64x256xf32>
    %141 = arith.cmpf oeq, %131, %140 : vector<64x256xf32>
    %142 = vector.broadcast %139 : vector<64x1xf32> to vector<64x256xf32>
    %143 = arith.cmpf oeq, %41, %142 : vector<64x256xf32>
    %144 = arith.andi %141, %143 : vector<64x256xi1>
    %cst_38 = arith.constant 0x7F800000 : f32
    %145 = vector.broadcast %cst_38 : f32 to vector<64x256xf32>
    %146 = arith.select %144, %145, %131 : vector<64x256xi1>, vector<64x256xf32>
    %cst_39 = arith.constant dense<0x7F800000> : vector<64xf32>
    %147 = vector.multi_reduction <minimumf>, %146, %cst_39 [1] : vector<64x256xf32> to vector<64xf32>
    %148 = vector.shape_cast %147 : vector<64xf32> to vector<64x1xf32>
    %149 = vector.broadcast %148 : vector<64x1xf32> to vector<64x256xf32>
    %150 = arith.cmpf oeq, %146, %149 : vector<64x256xf32>
    %cst_40 = arith.constant 3.000000e+38 : f32
    %151 = vector.broadcast %cst_40 : f32 to vector<64x256xf32>
    %152 = arith.select %150, %41, %151 : vector<64x256xi1>, vector<64x256xf32>
    %cst_41 = arith.constant dense<0x7F800000> : vector<64xf32>
    %153 = vector.multi_reduction <minimumf>, %152, %cst_41 [1] : vector<64x256xf32> to vector<64xf32>
    %154 = vector.shape_cast %153 : vector<64xf32> to vector<64x1xf32>
    %155 = tpu.concatenate %43, %58, %73, %88, %103, %118, %133, %148 in 1 : vector<64x1xf32>, vector<64x1xf32>, vector<64x1xf32>, vector<64x1xf32>, vector<64x1xf32>, vector<64x1xf32>, vector<64x1xf32>, vector<64x1xf32> -> vector<64x8xf32>
    %c0_42 = arith.constant 0 : index
    %c0_43 = arith.constant 0 : index
    %156 = vector.load %arg7[%c0_42, %c0_43] : memref<64x128xf32, #tpu.memory_space<vmem>>, vector<64x8xf32>
    tpu.vector_store %arg7[%c0_42, %c0_43], %155 {strides = array<i32>} : memref<64x128xf32, #tpu.memory_space<vmem>>, vector<64x8xf32>,
    %157 = tpu.concatenate %49, %64, %79, %94, %109, %124, %139, %154 in 1 : vector<64x1xf32>, vector<64x1xf32>, vector<64x1xf32>, vector<64x1xf32>, vector<64x1xf32>, vector<64x1xf32>, vector<64x1xf32>, vector<64x1xf32> -> vector<64x8xf32>
    %c0_44 = arith.constant 0 : index
    %c0_45 = arith.constant 0 : index
    %158 = vector.load %arg8[%c0_44, %c0_45] : memref<64x128xf32, #tpu.memory_space<vmem>>, vector<64x8xf32>
    tpu.vector_store %arg8[%c0_44, %c0_45], %157 {strides = array<i32>} : memref<64x128xf32, #tpu.memory_space<vmem>>, vector<64x8xf32>,
    %c0_i32_46 = arith.constant 0 : i32
    %159 = arith.cmpi eq, %arg2, %c0_i32_46 : i32
    %160 = arith.extui %159 : i1 to i32
    %c0_i32_47 = arith.constant 0 : i32
    %161 = arith.cmpi ne, %160, %c0_i32_47 : i32
    scf.if %161 {
      %c0_48 = arith.constant 0 : index
      %c0_49 = arith.constant 0 : index
      %162 = vector.load %arg7[%c0_48, %c0_49] : memref<64x128xf32, #tpu.memory_space<vmem>>, vector<64x8xf32>
      %c0_50 = arith.constant 0 : index
      %c0_51 = arith.constant 0 : index
      %c0_52 = arith.constant 0 : index
      %163 = vector.load %arg5[%c0_50, %c0_51, %c0_52] : memref<1x64x8xf32, #tpu.memory_space<vmem>>, vector<1x64x8xf32>
      %164 = vector.shape_cast %163 : vector<1x64x8xf32> to vector<64x8xf32>
      %165 = vector.shape_cast %162 : vector<64x8xf32> to vector<1x64x8xf32>
      tpu.vector_store %arg5[%c0_50, %c0_51, %c0_52], %165 {strides = array<i32>} : memref<1x64x8xf32, #tpu.memory_space<vmem>>, vector<1x64x8xf32>,
      %c0_53 = arith.constant 0 : index
      %c0_54 = arith.constant 0 : index
      %166 = vector.load %arg8[%c0_53, %c0_54] : memref<64x128xf32, #tpu.memory_space<vmem>>, vector<64x8xf32>
      %167 = arith.fptosi %166 : vector<64x8xf32> to vector<64x8xi32>
      %c0_55 = arith.constant 0 : index
      %c0_56 = arith.constant 0 : index
      %c0_57 = arith.constant 0 : index
      %168 = vector.load %arg6[%c0_55, %c0_56, %c0_57] : memref<1x64x8xi32, #tpu.memory_space<vmem>>, vector<1x64x8xi32>
      %169 = vector.shape_cast %168 : vector<1x64x8xi32> to vector<64x8xi32>
      %170 = vector.shape_cast %167 : vector<64x8xi32> to vector<1x64x8xi32>
      tpu.vector_store %arg6[%c0_55, %c0_56, %c0_57], %170 {strides = array<i32>} : memref<1x64x8xi32, #tpu.memory_space<vmem>>, vector<1x64x8xi32>,
    } else {
    }
    return
  }
  func.func @transform_0(%arg0: i32, %arg1: i32, %arg2: i32) -> (i32, i32, i32) {
    %c0_i32 = arith.constant 0 : i32
    %c0_i32_0 = arith.constant 0 : i32
    return %arg0, %arg1, %c0_i32 : i32, i32, i32
  }
  func.func @transform_1(%arg0: i32, %arg1: i32, %arg2: i32) -> (i32, i32, i32) {
    %c0_i32 = arith.constant 0 : i32
    %c0_i32_0 = arith.constant 0 : i32
    return %arg0, %c0_i32, %arg2 : i32, i32, i32
  }
  func.func @transform_2(%arg0: i32, %arg1: i32, %arg2: i32) -> (i32, i32, i32) {
    %c0_i32 = arith.constant 0 : i32
    %c0_i32_0 = arith.constant 0 : i32
    return %arg0, %arg1, %c0_i32 : i32, i32, i32
  }
  func.func @transform_3(%arg0: i32, %arg1: i32, %arg2: i32) -> (i32, i32, i32) {
    %c0_i32 = arith.constant 0 : i32
    %c0_i32_0 = arith.constant 0 : i32
    return %arg0, %arg1, %c0_i32 : i32, i32, i32
  }
}

</mosaic_0001>

<llo_original>
// kernel: tpu_custom_call.1
$region0: #{tpu_custom_call.1}
  #allocation0 [shape = 'u32[]', space=smem, size = 0x4, offset = 0x4, fixed_abs, tag = 'smem constant byte address 0x4 - core index']
  #allocation1 [shape = 'u32[144,128]{1,0:T(1,128)}', space=vmem, size = 0x12000, scoped, tag = 'internal scratch']
  #allocation2 [shape = 'f32[64,128]{1,0:T(8,128)}', space=vmem, size = 0x8000, scoped, tag = 'scratch operand']
  #allocation3 [shape = 'f32[64,128]{1,0:T(8,128)}', space=vmem, size = 0x8000, scoped, tag = 'scratch operand']
  %s0 = inlined_call_operand.vmem [shape: f32[2,64,3], index: 0, kind: input, shape index: {}]
  %s1 = inlined_call_operand.vmem [shape: f32[2,3,128], index: 1, kind: input, shape index: {}]
  %s2 = inlined_call_operand.vmem [shape: f32[2,64,8], index: 2, kind: output, shape index: {0}]
  %s3 = inlined_call_operand.vmem [shape: s32[2,64,8], index: 3, kind: output, shape index: {1}]
  %4 = xla_tuple %s2, %s3
  %s5 = sld [smem:[#allocation0]]
  $region57: #{tpu_custom_call.1} parent=0
    _
  %s7 = ssub.s32 1, %s5
  %s8 = scalar_select 0, %s7, %s5
  loop: start=0, step=1, limit=4
  $region2: #{tpu_custom_call.1} parent=0 // loop_pre_header
    _
  $region3: #{tpu_custom_call.1} parent=0 // loop_header
    %s10 = sphi 0, %s14
    %p11 = scmp.ge.s32.totalorder %s10, 4
    %s17 = sphi 0, %s36
    %s18 = sphi 0, %s32
    %s19 = sphi 0, %s28
    %s20 = sphi 0, %s17
    %s21 = sphi 0, %s18
    %s22 = sphi 0, %s19
    %s23 = sphi 0, %s20
    %s24 = sphi 0, %s21
    %s25 = sphi 0, %s22
    %s41 = sphi 0, %s43
    %s44 = sphi 0, %s41
    %s45 = sphi 0, %s44
    %s61 = sphi 0, %s45
    %s69 = sphi 0, %s71
    %s72 = sphi 0, %s69
    %s73 = sphi 0, %s72
    %s89 = sphi 0, %s73
    %s97 = sphi 0, %s99
    %s100 = sphi 0, %s97
    %s101 = sphi 0, %s100
    %s117 = sphi 0, %s101
    %s125 = sphi 0, %s127
    %s128 = sphi 0, %s125
    %s129 = sphi 0, %s128
    %s145 = sphi 0, %s129
  $region4: #{tpu_custom_call.1} parent=0 // loop_header_branch
    %13 = sbr.rel (%p11) target = $region8
  $region5: #{tpu_custom_call.1} parent=0 // loop_body
    %s15 = ssub.s32 %s10, 1
    %s16 = ssub.s32 %s10, 2
    %s26 = sadd.s32 1, %s19
    %p27 = scmp.ge.s32.totalorder %s26, 1
    %s28 = scalar_select %p27, 0, %s26
    %s29 = sadd.s32 1, %s18
    %s30 = scalar_select %p27, %s29, %s18
    %p31 = scmp.ge.s32.totalorder %s30, 1
    %s32 = scalar_select %p31, 0, %s30
    %s33 = sadd.s32 1, %s17
    %s34 = scalar_select %p31, %s33, %s17
    %p35 = scmp.ge.s32.totalorder %s34, 2
    %s36 = scalar_select %p35, 0, %s34
    %s37 = ssub.s32 %s17, %s36
    %s38 = ssub.s32 %s18, %s32
    %s39 = sor.u32 %s37, %s38
    %p40 = scmp.eq.s32.totalorder %s39, 0
    %s42 = sadd.s32 %s41, 1
    %s43 = scalar_select %p40, %s41, %s42
    %p46 = pneg %p40
    %p47 = scmp.eq.s32.totalorder %s10, 1
    %p48 = por %p46, %p47
    %p49 = scmp.ne.s32.totalorder %s41, %s44
    %p50 = scmp.eq.s32.totalorder %s10, 0
    %p51 = por %p49, %p50
    %p52 = scmp.ne.s32.totalorder %s41, %s44
    %p53 = scmp.eq.s32.totalorder %s15, 1
    %p54 = por %p52, %p53
    %p55 = scmp.ne.s32.totalorder %s44, %s45
    %p56 = scmp.eq.s32.totalorder %s15, 0
    %p57 = por %p55, %p56
    %p58 = scmp.ne.s32.totalorder %s44, %s45
    %p59 = scmp.eq.s32.totalorder %s16, 1
    %p60 = por %p58, %p59
    %p62 = scmp.ne.s32.totalorder %s45, %s61
    %p63 = scmp.eq.s32.totalorder %s16, 0
    %p64 = por %p62, %p63
    %s65 = ssub.s32 %s17, %s36
    %s66 = ssub.s32 %s19, %s28
    %s67 = sor.u32 %s65, %s66
    %p68 = scmp.eq.s32.totalorder %s67, 0
    %s70 = sadd.s32 %s69, 1
    %s71 = scalar_select %p68, %s69, %s70
    %p74 = pneg %p68
    %p75 = scmp.eq.s32.totalorder %s10, 1
    %p76 = por %p74, %p75
    %p77 = scmp.ne.s32.totalorder %s69, %s72
    %p78 = scmp.eq.s32.totalorder %s10, 0
    %p79 = por %p77, %p78
    %p80 = scmp.ne.s32.totalorder %s69, %s72
    %p81 = scmp.eq.s32.totalorder %s15, 1
    %p82 = por %p80, %p81
    %p83 = scmp.ne.s32.totalorder %s72, %s73
    %p84 = scmp.eq.s32.totalorder %s15, 0
    %p85 = por %p83, %p84
    %p86 = scmp.ne.s32.totalorder %s72, %s73
    %p87 = scmp.eq.s32.totalorder %s16, 1
    %p88 = por %p86, %p87
    %p90 = scmp.ne.s32.totalorder %s73, %s89
    %p91 = scmp.eq.s32.totalorder %s16, 0
    %p92 = por %p90, %p91
    %s93 = ssub.s32 %s17, %s36
    %s94 = ssub.s32 %s18, %s32
    %s95 = sor.u32 %s93, %s94
    %p96 = scmp.eq.s32.totalorder %s95, 0
    %s98 = sadd.s32 %s97, 1
    %s99 = scalar_select %p96, %s97, %s98
    %p102 = pneg %p96
    %p103 = scmp.eq.s32.totalorder %s10, 1
    %p104 = por %p102, %p103
    %p105 = scmp.ne.s32.totalorder %s97, %s100
    %p106 = scmp.eq.s32.totalorder %s10, 0
    %p107 = por %p105, %p106
    %p108 = scmp.ne.s32.totalorder %s97, %s100
    %p109 = scmp.eq.s32.totalorder %s15, 1
    %p110 = por %p108, %p109
    %p111 = scmp.ne.s32.totalorder %s100, %s101
    %p112 = scmp.eq.s32.totalorder %s15, 0
    %p113 = por %p111, %p112
    %p114 = scmp.ne.s32.totalorder %s100, %s101
    %p115 = scmp.eq.s32.totalorder %s16, 1
    %p116 = por %p114, %p115
    %p118 = scmp.ne.s32.totalorder %s101, %s117
    %p119 = scmp.eq.s32.totalorder %s16, 0
    %p120 = por %p118, %p119
    %s121 = ssub.s32 %s17, %s36
    %s122 = ssub.s32 %s18, %s32
    %s123 = sor.u32 %s121, %s122
    %p124 = scmp.eq.s32.totalorder %s123, 0
    %s126 = sadd.s32 %s125, 1
    %s127 = scalar_select %p124, %s125, %s126
    %p130 = pneg %p124
    %p131 = scmp.eq.s32.totalorder %s10, 1
    %p132 = por %p130, %p131
    %p133 = scmp.ne.s32.totalorder %s125, %s128
    %p134 = scmp.eq.s32.totalorder %s10, 0
    %p135 = por %p133, %p134
    %p136 = scmp.ne.s32.totalorder %s125, %s128
    %p137 = scmp.eq.s32.totalorder %s15, 1
    %p138 = por %p136, %p137
    %p139 = scmp.ne.s32.totalorder %s128, %s129
    %p140 = scmp.eq.s32.totalorder %s15, 0
    %p141 = por %p139, %p140
    %p142 = scmp.ne.s32.totalorder %s128, %s129
    %p143 = scmp.eq.s32.totalorder %s16, 1
    %p144 = por %p142, %p143
    %p146 = scmp.ne.s32.totalorder %s129, %s145
    %p147 = scmp.eq.s32.totalorder %s16, 0
    %p148 = por %p146, %p147
    %p149 = scmp.le.s32.totalorder 1, %s10
    %p150 = scmp.lt.s32.totalorder %s10, 3
    %p151 = pnand %p149, %p150
    %p152 = pneg %p151
    // Predicated region
    $region9: #{tpu_custom_call.1} parent=5 // pred_check
      _
    $region10: #{tpu_custom_call.1} parent=5 // pred_check_branch
      %154 = sbr.rel (%p151) target = $region12
    $region11: #{tpu_custom_call.1} parent=5 // pred_region
      %s155 = ssub.s32 %s10, 1
    $region12: #{tpu_custom_call.1} parent=5 // pred_fallthru
      _
    %p156 = scmp.lt.s32.totalorder %s10, 2
    // Predicated region
    $region13: #{tpu_custom_call.1} parent=5 // pred_check
      %p157 = pneg %p156
    $region14: #{tpu_custom_call.1} parent=5 // pred_check_branch
      %159 = sbr.rel (%p157) target = $region16
    $region15: #{tpu_custom_call.1} parent=5 // pred_region
      // Predicated region
      $region17: #{tpu_custom_call.1} parent=15 // pred_check
        %p160 = pneg %p51
      $region18: #{tpu_custom_call.1} parent=15 // pred_check_branch
        %162 = sbr.rel (%p160) target = $region20
      $region19: #{tpu_custom_call.1} parent=15 // pred_region
        %s163 = smul.u32 8, %s18
        %p164 = scmp.lt.s32.totalorder %s17, 1
        %s165 = scalar_select %p164, %s17, 1
        %p166 = scmp.lt.s32.totalorder %s163, 7
        %s167 = scalar_select %p166, %s163, 7
        %s168 = smul.addr %s165, 8
        %s169 = sadd.s32 %s167, %s168
        %s170 = smul.addr %s169, 8
        %s171 = scalar_lea.vmem %s0, %s170
        %s172 = smul.u32 8, %s18
      $region20: #{tpu_custom_call.1} parent=15 // pred_fallthru
        _
      // Predicated region
      $region21: #{tpu_custom_call.1} parent=15 // pred_check
        %p173 = pneg %p79
      $region22: #{tpu_custom_call.1} parent=15 // pred_check_branch
        %175 = sbr.rel (%p173) target = $region24
      $region23: #{tpu_custom_call.1} parent=15 // pred_region
        %p176 = scmp.lt.s32.totalorder %s17, 1
        %s177 = scalar_select %p176, %s17, 1
        %p178 = scmp.lt.s32.totalorder %s19, 0
        %s179 = scalar_select %p178, %s19, 0
        %s180 = sadd.s32 %s179, %s177
        %s181 = smul.addr %s180, 4
        %s182 = scalar_lea.vmem %s1, %s181
      $region24: #{tpu_custom_call.1} parent=15 // pred_fallthru
        _
    $region16: #{tpu_custom_call.1} parent=5 // pred_fallthru
      _
    %p183 = scmp.le.s32.totalorder 1, %s10
    %p184 = scmp.lt.s32.totalorder %s10, 3
    %p185 = pnand %p183, %p184
    %p186 = pneg %p185
    // Predicated region
    $region25: #{tpu_custom_call.1} parent=5 // pred_check
      _
    $region26: #{tpu_custom_call.1} parent=5 // pred_check_branch
      %188 = sbr.rel (%p185) target = $region28
    $region27: #{tpu_custom_call.1} parent=5 // pred_region
      %s189 = ssub.s32 %s10, 1
      %s190 = smul.u32 8, %s21
      %p191 = scmp.lt.s32.totalorder %s20, 1
      %s192 = scalar_select %p191, %s20, 1
      %p193 = scmp.lt.s32.totalorder %s190, 7
      %s194 = scalar_select %p193, %s190, 7
      %s195 = smul.addr %s192, 8
      %s196 = sadd.s32 %s194, %s195
      %s197 = smul.addr %s196, 8
      %s198 = scalar_lea.vmem %s0, %s197
      %p199 = pneg %p57
      %p200 = pneg %p54
      %p201 = scmp.lt.s32.totalorder %s20, 1
      %s202 = scalar_select %p201, %s20, 1
      %p203 = scmp.lt.s32.totalorder %s22, 0
      %s204 = scalar_select %p203, %s22, 0
      %s205 = sadd.s32 %s204, %s202
      %s206 = smul.addr %s205, 4
      %s207 = scalar_lea.vmem %s1, %s206
      %p208 = pneg %p85
      %p209 = pneg %p82
      %p210 = pneg %p113
      %p211 = pneg %p110
      %s212 = smul.u32 8, %s21
      %p213 = scmp.lt.s32.totalorder %s20, 1
      %s214 = scalar_select %p213, %s20, 1
      %p215 = scmp.lt.s32.totalorder %s212, 7
      %s216 = scalar_select %p215, %s212, 7
      %s217 = smul.addr %s214, 8
      %s218 = sadd.s32 %s216, %s217
      %s219 = smul.addr %s218, 8
      %s220 = scalar_lea.vmem %s2, %s219
      %p221 = pneg %p141
      %p222 = pneg %p138
      %s223 = smul.u32 8, %s21
      %p224 = scmp.lt.s32.totalorder %s20, 1
      %s225 = scalar_select %p224, %s20, 1
      %p226 = scmp.lt.s32.totalorder %s223, 7
      %s227 = scalar_select %p226, %s223, 7
      %s228 = smul.addr %s225, 8
      %s229 = sadd.s32 %s227, %s228
      %s230 = smul.addr %s229, 8
      %s231 = scalar_lea.vmem %s3, %s230
      %s232 = smul.u32 8, %s21
      %p233 = scmp.lt.s32.totalorder %s20, 1
      %s234 = scalar_select %p233, %s20, 1
      %p235 = scmp.lt.s32.totalorder %s232, 7
      %s236 = scalar_select %p235, %s232, 7
      %s237 = smul.addr %s234, 8
      %s238 = sadd.s32 %s236, %s237
      %s239 = smul.addr %s238, 8
      %s240 = scalar_lea.vmem %s0, %s239
      %s241 = smul.u32 8, %s21
      %p242 = scmp.lt.s32.totalorder %s20, 1
      %s243 = scalar_select %p242, %s20, 1
      %p244 = scmp.lt.s32.totalorder %s22, 0
      %s245 = scalar_select %p244, %s22, 0
      %s246 = sadd.s32 %s245, %s243
      %s247 = smul.addr %s246, 4
      %s248 = scalar_lea.vmem %s1, %s247
      %s249 = smul.u32 8, %s21
      %p250 = scmp.lt.s32.totalorder %s20, 1
      %s251 = scalar_select %p250, %s20, 1
      %p252 = scmp.lt.s32.totalorder %s249, 7
      %s253 = scalar_select %p252, %s249, 7
      %s254 = smul.addr %s251, 8
      %s255 = sadd.s32 %s253, %s254
      %s256 = smul.addr %s255, 8
      %s257 = scalar_lea.vmem %s2, %s256
      %s258 = smul.u32 8, %s21
      %s259 = smul.u32 8, %s21
      %p260 = scmp.lt.s32.totalorder %s20, 1
      %s261 = scalar_select %p260, %s20, 1
      %p262 = scmp.lt.s32.totalorder %s259, 7
      %s263 = scalar_select %p262, %s259, 7
      %s264 = smul.addr %s261, 8
      %s265 = sadd.s32 %s263, %s264
      %s266 = smul.addr %s265, 8
      %s267 = scalar_lea.vmem %s3, %s266
      %s268 = smul.u32 8, %s21
      %p269 = scmp.eq.s32.totalorder %s22, 0
      // Predicated region
      $region29: #{tpu_custom_call.1} parent=27 // pred_check
        %p270 = pneg %p269
      $region30: #{tpu_custom_call.1} parent=27 // pred_check_branch
        %272 = sbr.rel (%p270) target = $region32
      $region31: #{tpu_custom_call.1} parent=27 // pred_region
        %273 = vst [vmem:[#allocation2] sm:$0xff] inf
        %274 = vst [vmem:[#allocation2 + $0x8] sm:$0xff] inf
        %275 = vst [vmem:[#allocation2 + $0x10] sm:$0xff] inf
        %276 = vst [vmem:[#allocation2 + $0x18] sm:$0xff] inf
        %277 = vst [vmem:[#allocation2 + $0x20] sm:$0xff] inf
        %278 = vst [vmem:[#allocation2 + $0x28] sm:$0xff] inf
        %279 = vst [vmem:[#allocation2 + $0x30] sm:$0xff] inf
        %280 = vst [vmem:[#allocation2 + $0x38] sm:$0xff] inf
        %281 = vst [vmem:[#allocation3] sm:$0xff] 0.0
        %282 = vst [vmem:[#allocation3 + $0x8] sm:$0xff] 0.0
        %283 = vst [vmem:[#allocation3 + $0x10] sm:$0xff] 0.0
        %284 = vst [vmem:[#allocation3 + $0x18] sm:$0xff] 0.0
        %285 = vst [vmem:[#allocation3 + $0x20] sm:$0xff] 0.0
        %286 = vst [vmem:[#allocation3 + $0x28] sm:$0xff] 0.0
        %287 = vst [vmem:[#allocation3 + $0x30] sm:$0xff] 0.0
        %288 = vst [vmem:[#allocation3 + $0x38] sm:$0xff] 0.0
      $region32: #{tpu_custom_call.1} parent=27 // pred_fallthru
        _
      %v289 = vld [vmem:[%s240] sm:$0xff]
      %v290 = vld [vmem:[%s240 + $0x8] sm:$0xff]
      %v291 = vld [vmem:[%s240 + $0x10] sm:$0xff]
      %v292 = vld [vmem:[%s240 + $0x18] sm:$0xff]
      %v293 = vld [vmem:[%s240 + $0x20] sm:$0xff]
      %v294 = vld [vmem:[%s240 + $0x28] sm:$0xff]
      %v295 = vld [vmem:[%s240 + $0x30] sm:$0xff]
      %v296 = vld [vmem:[%s240 + $0x38] sm:$0xff]
      %v297 = vld [vmem:[%s248] sm:$0x7]
      %299 = vset.pattern.permute.xlu0 0
      %300 = vperm.xlu0 %299, %v289
      %v301 = vpop.permute.xlu0 %300
      %304 = vset.pattern.permute.xlu0 0
      %305 = vperm.xlu0 %304, %v290
      %v306 = vpop.permute.xlu0 %305
      %309 = vset.pattern.permute.xlu0 0
      %310 = vperm.xlu0 %309, %v291
      %v311 = vpop.permute.xlu0 %310
      %314 = vset.pattern.permute.xlu0 0
      %315 = vperm.xlu0 %314, %v292
      %v316 = vpop.permute.xlu0 %315
      %319 = vset.pattern.permute.xlu0 0
      %320 = vperm.xlu0 %319, %v293
      %v321 = vpop.permute.xlu0 %320
      %324 = vset.pattern.permute.xlu0 0
      %325 = vperm.xlu0 %324, %v294
      %v326 = vpop.permute.xlu0 %325
      %329 = vset.pattern.permute.xlu0 0
      %330 = vperm.xlu0 %329, %v295
      %v331 = vpop.permute.xlu0 %330
      %334 = vset.pattern.permute.xlu0 0
      %335 = vperm.xlu0 %334, %v296
      %v336 = vpop.permute.xlu0 %335
      %v338 = vlaneseq
      %v339 = vshrl.u32 %v338, 7
      %v340 = vsub.s32 0, %v339
      %v341 = vrot.slane %v297, %v340
      %v342 = vsub.f32 %v301, %v341
      %v343 = vsub.f32 %v306, %v341
      %v344 = vsub.f32 %v311, %v341
      %v345 = vsub.f32 %v316, %v341
      %v346 = vsub.f32 %v321, %v341
      %v347 = vsub.f32 %v326, %v341
      %v348 = vsub.f32 %v331, %v341
      %v349 = vsub.f32 %v336, %v341
      %v350 = vmul.f32 %v342, %v342
      %v351 = vmul.f32 %v343, %v343
      %v352 = vmul.f32 %v344, %v344
      %v353 = vmul.f32 %v345, %v345
      %v354 = vmul.f32 %v346, %v346
      %v355 = vmul.f32 %v347, %v347
      %v356 = vmul.f32 %v348, %v348
      %v357 = vmul.f32 %v349, %v349
      %v358 = vadd.f32 %v350, 0.0
      %v359 = vadd.f32 %v351, 0.0
      %v360 = vadd.f32 %v352, 0.0
      %v361 = vadd.f32 %v353, 0.0
      %v362 = vadd.f32 %v354, 0.0
      %v363 = vadd.f32 %v355, 0.0
      %v364 = vadd.f32 %v356, 0.0
      %v365 = vadd.f32 %v357, 0.0
      %366 = vset.pattern.permute.xlu0 1
      %367 = vperm.xlu0 %366, %v289
      %v368 = vpop.permute.xlu0 %367
      %370 = vset.pattern.permute.xlu0 1
      %371 = vperm.xlu0 %370, %v290
      %v372 = vpop.permute.xlu0 %371
      %374 = vset.pattern.permute.xlu0 1
      %375 = vperm.xlu0 %374, %v291
      %v376 = vpop.permute.xlu0 %375
      %378 = vset.pattern.permute.xlu0 1
      %379 = vperm.xlu0 %378, %v292
      %v380 = vpop.permute.xlu0 %379
      %382 = vset.pattern.permute.xlu0 1
      %383 = vperm.xlu0 %382, %v293
      %v384 = vpop.permute.xlu0 %383
      %386 = vset.pattern.permute.xlu0 1
      %387 = vperm.xlu0 %386, %v294
      %v388 = vpop.permute.xlu0 %387
      %390 = vset.pattern.permute.xlu0 1
      %391 = vperm.xlu0 %390, %v295
      %v392 = vpop.permute.xlu0 %391
      %394 = vset.pattern.permute.xlu0 1
      %395 = vperm.xlu0 %394, %v296
      %v396 = vpop.permute.xlu0 %395
      %v398 = vlaneseq
      %v399 = vshrl.u32 %v398, 7
      %v400 = vsub.s32 1, %v399
      %v401 = vrot.slane %v297, %v400
      %v402 = vsub.f32 %v368, %v401
      %v403 = vsub.f32 %v372, %v401
      %v404 = vsub.f32 %v376, %v401
      %v405 = vsub.f32 %v380, %v401
      %v406 = vsub.f32 %v384, %v401
      %v407 = vsub.f32 %v388, %v401
      %v408 = vsub.f32 %v392, %v401
      %v409 = vsub.f32 %v396, %v401
      %v410 = vmul.f32 %v402, %v402
      %v411 = vmul.f32 %v403, %v403
      %v412 = vmul.f32 %v404, %v404
      %v413 = vmul.f32 %v405, %v405
      %v414 = vmul.f32 %v406, %v406
      %v415 = vmul.f32 %v407, %v407
      %v416 = vmul.f32 %v408, %v408
      %v417 = vmul.f32 %v409, %v409
      %v418 = vadd.f32 %v358, %v410
      %v419 = vadd.f32 %v359, %v411
      %v420 = vadd.f32 %v360, %v412
      %v421 = vadd.f32 %v361, %v413
      %v422 = vadd.f32 %v362, %v414
      %v423 = vadd.f32 %v363, %v415
      %v424 = vadd.f32 %v364, %v416
      %v425 = vadd.f32 %v365, %v417
      %426 = vset.pattern.permute.xlu0 2
      %427 = vperm.xlu0 %426, %v289
      %v428 = vpop.permute.xlu0 %427
      %430 = vset.pattern.permute.xlu0 2
      %431 = vperm.xlu0 %430, %v290
      %v432 = vpop.permute.xlu0 %431
      %434 = vset.pattern.permute.xlu0 2
      %435 = vperm.xlu0 %434, %v291
      %v436 = vpop.permute.xlu0 %435
      %438 = vset.pattern.permute.xlu0 2
      %439 = vperm.xlu0 %438, %v292
      %v440 = vpop.permute.xlu0 %439
      %442 = vset.pattern.permute.xlu0 2
      %443 = vperm.xlu0 %442, %v293
      %v444 = vpop.permute.xlu0 %443
      %446 = vset.pattern.permute.xlu0 2
      %447 = vperm.xlu0 %446, %v294
      %v448 = vpop.permute.xlu0 %447
      %450 = vset.pattern.permute.xlu0 2
      %451 = vperm.xlu0 %450, %v295
      %v452 = vpop.permute.xlu0 %451
      %454 = vset.pattern.permute.xlu0 2
      %455 = vperm.xlu0 %454, %v296
      %v456 = vpop.permute.xlu0 %455
      %v458 = vlaneseq
      %v459 = vshrl.u32 %v458, 7
      %v460 = vsub.s32 2, %v459
      %v461 = vrot.slane %v297, %v460
      %v462 = vsub.f32 %v428, %v461
      %v463 = vsub.f32 %v432, %v461
      %v464 = vsub.f32 %v436, %v461
      %v465 = vsub.f32 %v440, %v461
      %v466 = vsub.f32 %v444, %v461
      %v467 = vsub.f32 %v448, %v461
      %v468 = vsub.f32 %v452, %v461
      %v469 = vsub.f32 %v456, %v461
      %v470 = vmul.f32 %v462, %v462
      %v471 = vmul.f32 %v463, %v463
      %v472 = vmul.f32 %v464, %v464
      %v473 = vmul.f32 %v465, %v465
      %v474 = vmul.f32 %v466, %v466
      %v475 = vmul.f32 %v467, %v467
      %v476 = vmul.f32 %v468, %v468
      %v477 = vmul.f32 %v469, %v469
      %v478 = vadd.f32 %v418, %v470
      %v479 = vadd.f32 %v419, %v471
      %v480 = vadd.f32 %v420, %v472
      %v481 = vadd.f32 %v421, %v473
      %v482 = vadd.f32 %v422, %v474
      %v483 = vadd.f32 %v423, %v475
      %v484 = vadd.f32 %v424, %v476
      %v485 = vadd.f32 %v425, %v477
      %v486 = vlaneseq
      %v487 = vand.u32 %v486, 127
      %s488 = smul.u32 %s22, 128
      %v489 = vstv %s488
      %v490 = vadd.s32 %v487, %v489
      %vm491 = vcmp.lt.s32.totalorder %v490, 64
      %v492 = vsel %vm491, %v478, inf
      %v493 = vsel %vm491, %v479, inf
      %v494 = vsel %vm491, %v480, inf
      %v495 = vsel %vm491, %v481, inf
      %v496 = vsel %vm491, %v482, inf
      %v497 = vsel %vm491, %v483, inf
      %v498 = vsel %vm491, %v484, inf
      %v499 = vsel %vm491, %v485, inf
      %v500 = vcvt.s32.f32 %v490
      %v501 = vld [vmem:[#allocation2] sm:$0xff]
      %v502 = vld [vmem:[#allocation2 + $0x8] sm:$0xff]
      %v503 = vld [vmem:[#allocation2 + $0x10] sm:$0xff]
      %v504 = vld [vmem:[#allocation2 + $0x18] sm:$0xff]
      %v505 = vld [vmem:[#allocation2 + $0x20] sm:$0xff]
      %v506 = vld [vmem:[#allocation2 + $0x28] sm:$0xff]
      %v507 = vld [vmem:[#allocation2 + $0x30] sm:$0xff]
      %v508 = vld [vmem:[#allocation2 + $0x38] sm:$0xff]
      %v509 = vld [vmem:[#allocation3] sm:$0xff]
      %v510 = vld [vmem:[#allocation3 + $0x8] sm:$0xff]
      %v511 = vld [vmem:[#allocation3 + $0x10] sm:$0xff]
      %v512 = vld [vmem:[#allocation3 + $0x18] sm:$0xff]
      %v513 = vld [vmem:[#allocation3 + $0x20] sm:$0xff]
      %v514 = vld [vmem:[#allocation3 + $0x28] sm:$0xff]
      %v515 = vld [vmem:[#allocation3 + $0x30] sm:$0xff]
      %v516 = vld [vmem:[#allocation3 + $0x38] sm:$0xff]
      %v517 = vmin.f32 %v501, %v492
      %518 = vmin.xlane.f32.xlu0 %v517
      %v519 = vpop.xlane.xlu0 %518
      %v520 = vmin.f32 %v502, %v493
      %521 = vmin.xlane.f32.xlu0 %v520
      %v522 = vpop.xlane.xlu0 %521
      %v523 = vmin.f32 %v503, %v494
      %524 = vmin.xlane.f32.xlu0 %v523
      %v525 = vpop.xlane.xlu0 %524
      %v526 = vmin.f32 %v504, %v495
      %527 = vmin.xlane.f32.xlu0 %v526
      %v528 = vpop.xlane.xlu0 %527
      %v529 = vmin.f32 %v505, %v496
      %530 = vmin.xlane.f32.xlu0 %v529
      %v531 = vpop.xlane.xlu0 %530
      %v532 = vmin.f32 %v506, %v497
      %533 = vmin.xlane.f32.xlu0 %v532
      %v534 = vpop.xlane.xlu0 %533
      %v535 = vmin.f32 %v507, %v498
      %536 = vmin.xlane.f32.xlu0 %v535
      %v537 = vpop.xlane.xlu0 %536
      %v538 = vmin.f32 %v508, %v499
      %539 = vmin.xlane.f32.xlu0 %v538
      %v540 = vpop.xlane.xlu0 %539
      %vm541 = vcmp.eq.f32.partialorder %v501, %v519
      %vm542 = vcmp.eq.f32.partialorder %v492, %v519
      %vm543 = vcmp.eq.f32.partialorder %v502, %v522
      %vm544 = vcmp.eq.f32.partialorder %v493, %v522
      %vm545 = vcmp.eq.f32.partialorder %v503, %v525
      %vm546 = vcmp.eq.f32.partialorder %v494, %v525
      %vm547 = vcmp.eq.f32.partialorder %v504, %v528
      %vm548 = vcmp.eq.f32.partialorder %v495, %v528
      %vm549 = vcmp.eq.f32.partialorder %v505, %v531
      %vm550 = vcmp.eq.f32.partialorder %v496, %v531
      %vm551 = vcmp.eq.f32.partialorder %v506, %v534
      %vm552 = vcmp.eq.f32.partialorder %v497, %v534
      %vm553 = vcmp.eq.f32.partialorder %v507, %v537
      %vm554 = vcmp.eq.f32.partialorder %v498, %v537
      %vm555 = vcmp.eq.f32.partialorder %v508, %v540
      %vm556 = vcmp.eq.f32.partialorder %v499, %v540
      %v557 = vsel %vm541, %v509, 3e+38
      %v558 = vsel %vm542, %v500, 3e+38
      %v559 = vsel %vm543, %v510, 3e+38
      %v560 = vsel %vm544, %v500, 3e+38
      %v561 = vsel %vm545, %v511, 3e+38
      %v562 = vsel %vm546, %v500, 3e+38
      %v563 = vsel %vm547, %v512, 3e+38
      %v564 = vsel %vm548, %v500, 3e+38
      %v565 = vsel %vm549, %v513, 3e+38
      %v566 = vsel %vm550, %v500, 3e+38
      %v567 = vsel %vm551, %v514, 3e+38
      %v568 = vsel %vm552, %v500, 3e+38
      %v569 = vsel %vm553, %v515, 3e+38
      %v570 = vsel %vm554, %v500, 3e+38
      %v571 = vsel %vm555, %v516, 3e+38
      %v572 = vsel %vm556, %v500, 3e+38
      %v573 = vmin.f32 %v557, %v558
      %574 = vmin.xlane.f32.xlu0 %v573
      %v575 = vpop.xlane.xlu0 %574
      %v576 = vmin.f32 %v559, %v560
      %577 = vmin.xlane.f32.xlu0 %v576
      %v578 = vpop.xlane.xlu0 %577
      %v579 = vmin.f32 %v561, %v562
      %580 = vmin.xlane.f32.xlu0 %v579
      %v581 = vpop.xlane.xlu0 %580
      %v582 = vmin.f32 %v563, %v564
      %583 = vmin.xlane.f32.xlu0 %v582
      %v584 = vpop.xlane.xlu0 %583
      %v585 = vmin.f32 %v565, %v566
      %586 = vmin.xlane.f32.xlu0 %v585
      %v587 = vpop.xlane.xlu0 %586
      %v588 = vmin.f32 %v567, %v568
      %589 = vmin.xlane.f32.xlu0 %v588
      %v590 = vpop.xlane.xlu0 %589
      %v591 = vmin.f32 %v569, %v570
      %592 = vmin.xlane.f32.xlu0 %v591
      %v593 = vpop.xlane.xlu0 %592
      %v594 = vmin.f32 %v571, %v572
      %595 = vmin.xlane.f32.xlu0 %v594
      %v596 = vpop.xlane.xlu0 %595
      %vm597 = vcmp.eq.f32.partialorder %v509, %v575
      %vm598 = vcmp.eq.f32.partialorder %v500, %v575
      %vm599 = vcmp.eq.f32.partialorder %v510, %v578
      %vm600 = vcmp.eq.f32.partialorder %v500, %v578
      %vm601 = vcmp.eq.f32.partialorder %v511, %v581
      %vm602 = vcmp.eq.f32.partialorder %v500, %v581
      %vm603 = vcmp.eq.f32.partialorder %v512, %v584
      %vm604 = vcmp.eq.f32.partialorder %v500, %v584
      %vm605 = vcmp.eq.f32.partialorder %v513, %v587
      %vm606 = vcmp.eq.f32.partialorder %v500, %v587
      %vm607 = vcmp.eq.f32.partialorder %v514, %v590
      %vm608 = vcmp.eq.f32.partialorder %v500, %v590
      %vm609 = vcmp.eq.f32.partialorder %v515, %v593
      %vm610 = vcmp.eq.f32.partialorder %v500, %v593
      %vm611 = vcmp.eq.f32.partialorder %v516, %v596
      %vm612 = vcmp.eq.f32.partialorder %v500, %v596
      %vm613 = vmand %vm541, %vm597
      %vm614 = vmand %vm542, %vm598
      %vm615 = vmand %vm543, %vm599
      %vm616 = vmand %vm544, %vm600
      %vm617 = vmand %vm545, %vm601
      %vm618 = vmand %vm546, %vm602
      %vm619 = vmand %vm547, %vm603
      %vm620 = vmand %vm548, %vm604
      %vm621 = vmand %vm549, %vm605
      %vm622 = vmand %vm550, %vm606
      %vm623 = vmand %vm551, %vm607
      %vm624 = vmand %vm552, %vm608
      %vm625 = vmand %vm553, %vm609
      %vm626 = vmand %vm554, %vm610
      %vm627 = vmand %vm555, %vm611
      %vm628 = vmand %vm556, %vm612
      %v629 = vsel %vm613, inf, %v501
      %v630 = vsel %vm614, inf, %v492
      %v631 = vsel %vm615, inf, %v502
      %v632 = vsel %vm616, inf, %v493
      %v633 = vsel %vm617, inf, %v503
      %v634 = vsel %vm618, inf, %v494
      %v635 = vsel %vm619, inf, %v504
      %v636 = vsel %vm620, inf, %v495
      %v637 = vsel %vm621, inf, %v505
      %v638 = vsel %vm622, inf, %v496
      %v639 = vsel %vm623, inf, %v506
      %v640 = vsel %vm624, inf, %v497
      %v641 = vsel %vm625, inf, %v507
      %v642 = vsel %vm626, inf, %v498
      %v643 = vsel %vm627, inf, %v508
      %v644 = vsel %vm628, inf, %v499
      %v645 = vmin.f32 %v629, %v630
      %646 = vmin.xlane.f32.xlu0 %v645
      %v647 = vpop.xlane.xlu0 %646
      %v648 = vmin.f32 %v631, %v632
      %649 = vmin.xlane.f32.xlu0 %v648
      %v650 = vpop.xlane.xlu0 %649
      %v651 = vmin.f32 %v633, %v634
      %652 = vmin.xlane.f32.xlu0 %v651
      %v653 = vpop.xlane.xlu0 %652
      %v654 = vmin.f32 %v635, %v636
      %655 = vmin.xlane.f32.xlu0 %v654
      %v656 = vpop.xlane.xlu0 %655
      %v657 = vmin.f32 %v637, %v638
      %658 = vmin.xlane.f32.xlu0 %v657
      %v659 = vpop.xlane.xlu0 %658
      %v660 = vmin.f32 %v639, %v640
      %661 = vmin.xlane.f32.xlu0 %v660
      %v662 = vpop.xlane.xlu0 %661
      %v663 = vmin.f32 %v641, %v642
      %664 = vmin.xlane.f32.xlu0 %v663
      %v665 = vpop.xlane.xlu0 %664
      %v666 = vmin.f32 %v643, %v644
      %667 = vmin.xlane.f32.xlu0 %v666
      %v668 = vpop.xlane.xlu0 %667
      %vm669 = vcmp.eq.f32.partialorder %v629, %v647
      %vm670 = vcmp.eq.f32.partialorder %v630, %v647
      %vm671 = vcmp.eq.f32.partialorder %v631, %v650
      %vm672 = vcmp.eq.f32.partialorder %v632, %v650
      %vm673 = vcmp.eq.f32.partialorder %v633, %v653
      %vm674 = vcmp.eq.f32.partialorder %v634, %v653
      %vm675 = vcmp.eq.f32.partialorder %v635, %v656
      %vm676 = vcmp.eq.f32.partialorder %v636, %v656
      %vm677 = vcmp.eq.f32.partialorder %v637, %v659
      %vm678 = vcmp.eq.f32.partialorder %v638, %v659
      %vm679 = vcmp.eq.f32.partialorder %v639, %v662
      %vm680 = vcmp.eq.f32.partialorder %v640, %v662
      %vm681 = vcmp.eq.f32.partialorder %v641, %v665
      %vm682 = vcmp.eq.f32.partialorder %v642, %v665
      %vm683 = vcmp.eq.f32.partialorder %v643, %v668
      %vm684 = vcmp.eq.f32.partialorder %v644, %v668
      %v685 = vsel %vm669, %v509, 3e+38
      %v686 = vsel %vm670, %v500, 3e+38
      %v687 = vsel %vm671, %v510, 3e+38
      %v688 = vsel %vm672, %v500, 3e+38
      %v689 = vsel %vm673, %v511, 3e+38
      %v690 = vsel %vm674, %v500, 3e+38
      %v691 = vsel %vm675, %v512, 3e+38
      %v692 = vsel %vm676, %v500, 3e+38
      %v693 = vsel %vm677, %v513, 3e+38
      %v694 = vsel %vm678, %v500, 3e+38
      %v695 = vsel %vm679, %v514, 3e+38
      %v696 = vsel %vm680, %v500, 3e+38
      %v697 = vsel %vm681, %v515, 3e+38
      %v698 = vsel %vm682, %v500, 3e+38
      %v699 = vsel %vm683, %v516, 3e+38
      %v700 = vsel %vm684, %v500, 3e+38
      %v701 = vmin.f32 %v685, %v686
      %702 = vmin.xlane.f32.xlu0 %v701
      %v703 = vpop.xlane.xlu0 %702
      %v704 = vmin.f32 %v687, %v688
      %705 = vmin.xlane.f32.xlu0 %v704
      %v706 = vpop.xlane.xlu0 %705
      %v707 = vmin.f32 %v689, %v690
      %708 = vmin.xlane.f32.xlu0 %v707
      %v709 = vpop.xlane.xlu0 %708
      %v710 = vmin.f32 %v691, %v692
      %711 = vmin.xlane.f32.xlu0 %v710
      %v712 = vpop.xlane.xlu0 %711
      %v713 = vmin.f32 %v693, %v694
      %714 = vmin.xlane.f32.xlu0 %v713
      %v715 = vpop.xlane.xlu0 %714
      %v716 = vmin.f32 %v695, %v696
      %717 = vmin.xlane.f32.xlu0 %v716
      %v718 = vpop.xlane.xlu0 %717
      %v719 = vmin.f32 %v697, %v698
      %720 = vmin.xlane.f32.xlu0 %v719
      %v721 = vpop.xlane.xlu0 %720
      %v722 = vmin.f32 %v699, %v700
      %723 = vmin.xlane.f32.xlu0 %v722
      %v724 = vpop.xlane.xlu0 %723
      %vm725 = vcmp.eq.f32.partialorder %v509, %v703
      %vm726 = vcmp.eq.f32.partialorder %v500, %v703
      %vm727 = vcmp.eq.f32.partialorder %v510, %v706
      %vm728 = vcmp.eq.f32.partialorder %v500, %v706
      %vm729 = vcmp.eq.f32.partialorder %v511, %v709
      %vm730 = vcmp.eq.f32.partialorder %v500, %v709
      %vm731 = vcmp.eq.f32.partialorder %v512, %v712
      %vm732 = vcmp.eq.f32.partialorder %v500, %v712
      %vm733 = vcmp.eq.f32.partialorder %v513, %v715
      %vm734 = vcmp.eq.f32.partialorder %v500, %v715
      %vm735 = vcmp.eq.f32.partialorder %v514, %v718
      %vm736 = vcmp.eq.f32.partialorder %v500, %v718
      %vm737 = vcmp.eq.f32.partialorder %v515, %v721
      %vm738 = vcmp.eq.f32.partialorder %v500, %v721
      %vm739 = vcmp.eq.f32.partialorder %v516, %v724
      %vm740 = vcmp.eq.f32.partialorder %v500, %v724
      %vm741 = vmand %vm669, %vm725
      %vm742 = vmand %vm670, %vm726
      %vm743 = vmand %vm671, %vm727
      %vm744 = vmand %vm672, %vm728
      %vm745 = vmand %vm673, %vm729
      %vm746 = vmand %vm674, %vm730
      %vm747 = vmand %vm675, %vm731
      %vm748 = vmand %vm676, %vm732
      %vm749 = vmand %vm677, %vm733
      %vm750 = vmand %vm678, %vm734
      %vm751 = vmand %vm679, %vm735
      %vm752 = vmand %vm680, %vm736
      %vm753 = vmand %vm681, %vm737
      %vm754 = vmand %vm682, %vm738
      %vm755 = vmand %vm683, %vm739
      %vm756 = vmand %vm684, %vm740
      %v757 = vsel %vm741, inf, %v629
      %v758 = vsel %vm742, inf, %v630
      %v759 = vsel %vm743, inf, %v631
      %v760 = vsel %vm744, inf, %v632
      %v761 = vsel %vm745, inf, %v633
      %v762 = vsel %vm746, inf, %v634
      %v763 = vsel %vm747, inf, %v635
      %v764 = vsel %vm748, inf, %v636
      %v765 = vsel %vm749, inf, %v637
      %v766 = vsel %vm750, inf, %v638
      %v767 = vsel %vm751, inf, %v639
      %v768 = vsel %vm752, inf, %v640
      %v769 = vsel %vm753, inf, %v641
      %v770 = vsel %vm754, inf, %v642
      %v771 = vsel %vm755, inf, %v643
      %v772 = vsel %vm756, inf, %v644
      %v773 = vmin.f32 %v757, %v758
      %774 = vmin.xlane.f32.xlu0 %v773
      %v775 = vpop.xlane.xlu0 %774
      %v776 = vmin.f32 %v759, %v760
      %777 = vmin.xlane.f32.xlu0 %v776
      %v778 = vpop.xlane.xlu0 %777
      %v779 = vmin.f32 %v761, %v762
      %780 = vmin.xlane.f32.xlu0 %v779
      %v781 = vpop.xlane.xlu0 %780
      %v782 = vmin.f32 %v763, %v764
      %783 = vmin.xlane.f32.xlu0 %v782
      %v784 = vpop.xlane.xlu0 %783
      %v785 = vmin.f32 %v765, %v766
      %786 = vmin.xlane.f32.xlu0 %v785
      %v787 = vpop.xlane.xlu0 %786
      %v788 = vmin.f32 %v767, %v768
      %789 = vmin.xlane.f32.xlu0 %v788
      %v790 = vpop.xlane.xlu0 %789
      %v791 = vmin.f32 %v769, %v770
      %792 = vmin.xlane.f32.xlu0 %v791
      %v793 = vpop.xlane.xlu0 %792
      %v794 = vmin.f32 %v771, %v772
      %795 = vmin.xlane.f32.xlu0 %v794
      %v796 = vpop.xlane.xlu0 %795
      %vm797 = vcmp.eq.f32.partialorder %v757, %v775
      %vm798 = vcmp.eq.f32.partialorder %v758, %v775
      %vm799 = vcmp.eq.f32.partialorder %v759, %v778
      %vm800 = vcmp.eq.f32.partialorder %v760, %v778
      %vm801 = vcmp.eq.f32.partialorder %v761, %v781
      %vm802 = vcmp.eq.f32.partialorder %v762, %v781
      %vm803 = vcmp.eq.f32.partialorder %v763, %v784
      %vm804 = vcmp.eq.f32.partialorder %v764, %v784
      %vm805 = vcmp.eq.f32.partialorder %v765, %v787
      %vm806 = vcmp.eq.f32.partialorder %v766, %v787
      %vm807 = vcmp.eq.f32.partialorder %v767, %v790
      %vm808 = vcmp.eq.f32.partialorder %v768, %v790
      %vm809 = vcmp.eq.f32.partialorder %v769, %v793
      %vm810 = vcmp.eq.f32.partialorder %v770, %v793
      %vm811 = vcmp.eq.f32.partialorder %v771, %v796
      %vm812 = vcmp.eq.f32.partialorder %v772, %v796
      %v813 = vsel %vm797, %v509, 3e+38
      %v814 = vsel %vm798, %v500, 3e+38
      %v815 = vsel %vm799, %v510, 3e+38
      %v816 = vsel %vm800, %v500, 3e+38
      %v817 = vsel %vm801, %v511, 3e+38
      %v818 = vsel %vm802, %v500, 3e+38
      %v819 = vsel %vm803, %v512, 3e+38
      %v820 = vsel %vm804, %v500, 3e+38
      %v821 = vsel %vm805, %v513, 3e+38
      %v822 = vsel %vm806, %v500, 3e+38
      %v823 = vsel %vm807, %v514, 3e+38
      %v824 = vsel %vm808, %v500, 3e+38
      %v825 = vsel %vm809, %v515, 3e+38
      %v826 = vsel %vm810, %v500, 3e+38
      %v827 = vsel %vm811, %v516, 3e+38
      %v828 = vsel %vm812, %v500, 3e+38
      %v829 = vmin.f32 %v813, %v814
      %830 = vmin.xlane.f32.xlu0 %v829
      %v831 = vpop.xlane.xlu0 %830
      %v832 = vmin.f32 %v815, %v816
      %833 = vmin.xlane.f32.xlu0 %v832
      %v834 = vpop.xlane.xlu0 %833
      %v835 = vmin.f32 %v817, %v818
      %836 = vmin.xlane.f32.xlu0 %v835
      %v837 = vpop.xlane.xlu0 %836
      %v838 = vmin.f32 %v819, %v820
      %839 = vmin.xlane.f32.xlu0 %v838
      %v840 = vpop.xlane.xlu0 %839
      %v841 = vmin.f32 %v821, %v822
      %842 = vmin.xlane.f32.xlu0 %v841
      %v843 = vpop.xlane.xlu0 %842
      %v844 = vmin.f32 %v823, %v824
      %845 = vmin.xlane.f32.xlu0 %v844
      %v846 = vpop.xlane.xlu0 %845
      %v847 = vmin.f32 %v825, %v826
      %848 = vmin.xlane.f32.xlu0 %v847
      %v849 = vpop.xlane.xlu0 %848
      %v850 = vmin.f32 %v827, %v828
      %851 = vmin.xlane.f32.xlu0 %v850
      %v852 = vpop.xlane.xlu0 %851
      %vm853 = vcmp.eq.f32.partialorder %v509, %v831
      %vm854 = vcmp.eq.f32.partialorder %v500, %v831
      %vm855 = vcmp.eq.f32.partialorder %v510, %v834
      %vm856 = vcmp.eq.f32.partialorder %v500, %v834
      %vm857 = vcmp.eq.f32.partialorder %v511, %v837
      %vm858 = vcmp.eq.f32.partialorder %v500, %v837
      %vm859 = vcmp.eq.f32.partialorder %v512, %v840
      %vm860 = vcmp.eq.f32.partialorder %v500, %v840
      %vm861 = vcmp.eq.f32.partialorder %v513, %v843
      %vm862 = vcmp.eq.f32.partialorder %v500, %v843
      %vm863 = vcmp.eq.f32.partialorder %v514, %v846
      %vm864 = vcmp.eq.f32.partialorder %v500, %v846
      %vm865 = vcmp.eq.f32.partialorder %v515, %v849
      %vm866 = vcmp.eq.f32.partialorder %v500, %v849
      %vm867 = vcmp.eq.f32.partialorder %v516, %v852
      %vm868 = vcmp.eq.f32.partialorder %v500, %v852
      %vm869 = vmand %vm797, %vm853
      %vm870 = vmand %vm798, %vm854
      %vm871 = vmand %vm799, %vm855
      %vm872 = vmand %vm800, %vm856
      %vm873 = vmand %vm801, %vm857
      %vm874 = vmand %vm802, %vm858
      %vm875 = vmand %vm803, %vm859
      %vm876 = vmand %vm804, %vm860
      %vm877 = vmand %vm805, %vm861
      %vm878 = vmand %vm806, %vm862
      %vm879 = vmand %vm807, %vm863
      %vm880 = vmand %vm808, %vm864
      %vm881 = vmand %vm809, %vm865
      %vm882 = vmand %vm810, %vm866
      %vm883 = vmand %vm811, %vm867
      %vm884 = vmand %vm812, %vm868
      %v885 = vsel %vm869, inf, %v757
      %v886 = vsel %vm870, inf, %v758
      %v887 = vsel %vm871, inf, %v759
      %v888 = vsel %vm872, inf, %v760
      %v889 = vsel %vm873, inf, %v761
      %v890 = vsel %vm874, inf, %v762
      %v891 = vsel %vm875, inf, %v763
      %v892 = vsel %vm876, inf, %v764
      %v893 = vsel %vm877, inf, %v765
      %v894 = vsel %vm878, inf, %v766
      %v895 = vsel %vm879, inf, %v767
      %v896 = vsel %vm880, inf, %v768
      %v897 = vsel %vm881, inf, %v769
      %v898 = vsel %vm882, inf, %v770
      %v899 = vsel %vm883, inf, %v771
      %v900 = vsel %vm884, inf, %v772
      %v901 = vmin.f32 %v885, %v886
      %902 = vmin.xlane.f32.xlu0 %v901
      %v903 = vpop.xlane.xlu0 %902
      %v904 = vmin.f32 %v887, %v888
      %905 = vmin.xlane.f32.xlu0 %v904
      %v906 = vpop.xlane.xlu0 %905
      %v907 = vmin.f32 %v889, %v890
      %908 = vmin.xlane.f32.xlu0 %v907
      %v909 = vpop.xlane.xlu0 %908
      %v910 = vmin.f32 %v891, %v892
      %911 = vmin.xlane.f32.xlu0 %v910
      %v912 = vpop.xlane.xlu0 %911
      %v913 = vmin.f32 %v893, %v894
      %914 = vmin.xlane.f32.xlu0 %v913
      %v915 = vpop.xlane.xlu0 %914
      %v916 = vmin.f32 %v895, %v896
      %917 = vmin.xlane.f32.xlu0 %v916
      %v918 = vpop.xlane.xlu0 %917
      %v919 = vmin.f32 %v897, %v898
      %920 = vmin.xlane.f32.xlu0 %v919
      %v921 = vpop.xlane.xlu0 %920
      %v922 = vmin.f32 %v899, %v900
      %923 = vmin.xlane.f32.xlu0 %v922
      %v924 = vpop.xlane.xlu0 %923
      %vm925 = vcmp.eq.f32.partialorder %v885, %v903
      %vm926 = vcmp.eq.f32.partialorder %v886, %v903
      %vm927 = vcmp.eq.f32.partialorder %v887, %v906
      %vm928 = vcmp.eq.f32.partialorder %v888, %v906
      %vm929 = vcmp.eq.f32.partialorder %v889, %v909
      %vm930 = vcmp.eq.f32.partialorder %v890, %v909
      %vm931 = vcmp.eq.f32.partialorder %v891, %v912
      %vm932 = vcmp.eq.f32.partialorder %v892, %v912
      %vm933 = vcmp.eq.f32.partialorder %v893, %v915
      %vm934 = vcmp.eq.f32.partialorder %v894, %v915
      %vm935 = vcmp.eq.f32.partialorder %v895, %v918
      %vm936 = vcmp.eq.f32.partialorder %v896, %v918
      %vm937 = vcmp.eq.f32.partialorder %v897, %v921
      %vm938 = vcmp.eq.f32.partialorder %v898, %v921
      %vm939 = vcmp.eq.f32.partialorder %v899, %v924
      %vm940 = vcmp.eq.f32.partialorder %v900, %v924
      %v941 = vsel %vm925, %v509, 3e+38
      %v942 = vsel %vm926, %v500, 3e+38
      %v943 = vsel %vm927, %v510, 3e+38
      %v944 = vsel %vm928, %v500, 3e+38
      %v945 = vsel %vm929, %v511, 3e+38
      %v946 = vsel %vm930, %v500, 3e+38
      %v947 = vsel %vm931, %v512, 3e+38
      %v948 = vsel %vm932, %v500, 3e+38
      %v949 = vsel %vm933, %v513, 3e+38
      %v950 = vsel %vm934, %v500, 3e+38
      %v951 = vsel %vm935, %v514, 3e+38
      %v952 = vsel %vm936, %v500, 3e+38
      %v953 = vsel %vm937, %v515, 3e+38
      %v954 = vsel %vm938, %v500, 3e+38
      %v955 = vsel %vm939, %v516, 3e+38
      %v956 = vsel %vm940, %v500, 3e+38
      %v957 = vmin.f32 %v941, %v942
      %958 = vmin.xlane.f32.xlu0 %v957
      %v959 = vpop.xlane.xlu0 %958
      %v960 = vmin.f32 %v943, %v944
      %961 = vmin.xlane.f32.xlu0 %v960
      %v962 = vpop.xlane.xlu0 %961
      %v963 = vmin.f32 %v945, %v946
      %964 = vmin.xlane.f32.xlu0 %v963
      %v965 = vpop.xlane.xlu0 %964
      %v966 = vmin.f32 %v947, %v948
      %967 = vmin.xlane.f32.xlu0 %v966
      %v968 = vpop.xlane.xlu0 %967
      %v969 = vmin.f32 %v949, %v950
      %970 = vmin.xlane.f32.xlu0 %v969
      %v971 = vpop.xlane.xlu0 %970
      %v972 = vmin.f32 %v951, %v952
      %973 = vmin.xlane.f32.xlu0 %v972
      %v974 = vpop.xlane.xlu0 %973
      %v975 = vmin.f32 %v953, %v954
      %976 = vmin.xlane.f32.xlu0 %v975
      %v977 = vpop.xlane.xlu0 %976
      %v978 = vmin.f32 %v955, %v956
      %979 = vmin.xlane.f32.xlu0 %v978
      %v980 = vpop.xlane.xlu0 %979
      %vm981 = vcmp.eq.f32.partialorder %v509, %v959
      %vm982 = vcmp.eq.f32.partialorder %v500, %v959
      %vm983 = vcmp.eq.f32.partialorder %v510, %v962
      %vm984 = vcmp.eq.f32.partialorder %v500, %v962
      %vm985 = vcmp.eq.f32.partialorder %v511, %v965
      %vm986 = vcmp.eq.f32.partialorder %v500, %v965
      %vm987 = vcmp.eq.f32.partialorder %v512, %v968
      %vm988 = vcmp.eq.f32.partialorder %v500, %v968
      %vm989 = vcmp.eq.f32.partialorder %v513, %v971
      %vm990 = vcmp.eq.f32.partialorder %v500, %v971
      %vm991 = vcmp.eq.f32.partialorder %v514, %v974
      %vm992 = vcmp.eq.f32.partialorder %v500, %v974
      %vm993 = vcmp.eq.f32.partialorder %v515, %v977
      %vm994 = vcmp.eq.f32.partialorder %v500, %v977
      %vm995 = vcmp.eq.f32.partialorder %v516, %v980
      %vm996 = vcmp.eq.f32.partialorder %v500, %v980
      %vm997 = vmand %vm925, %vm981
      %vm998 = vmand %vm926, %vm982
      %vm999 = vmand %vm927, %vm983
      %vm1000 = vmand %vm928, %vm984
      %vm1001 = vmand %vm929, %vm985
      %vm1002 = vmand %vm930, %vm986
      %vm1003 = vmand %vm931, %vm987
      %vm1004 = vmand %vm932, %vm988
      %vm1005 = vmand %vm933, %vm989
      %vm1006 = vmand %vm934, %vm990
      %vm1007 = vmand %vm935, %vm991
      %vm1008 = vmand %vm936, %vm992
      %vm1009 = vmand %vm937, %vm993
      %vm1010 = vmand %vm938, %vm994
      %vm1011 = vmand %vm939, %vm995
      %vm1012 = vmand %vm940, %vm996
      %v1013 = vsel %vm997, inf, %v885
      %v1014 = vsel %vm998, inf, %v886
      %v1015 = vsel %vm999, inf, %v887
      %v1016 = vsel %vm1000, inf, %v888
      %v1017 = vsel %vm1001, inf, %v889
      %v1018 = vsel %vm1002, inf, %v890
      %v1019 = vsel %vm1003, inf, %v891
      %v1020 = vsel %vm1004, inf, %v892
      %v1021 = vsel %vm1005, inf, %v893
      %v1022 = vsel %vm1006, inf, %v894
      %v1023 = vsel %vm1007, inf, %v895
      %v1024 = vsel %vm1008, inf, %v896
      %v1025 = vsel %vm1009, inf, %v897
      %v1026 = vsel %vm1010, inf, %v898
      %v1027 = vsel %vm1011, inf, %v899
      %v1028 = vsel %vm1012, inf, %v900
      %v1029 = vmin.f32 %v1013, %v1014
      %1030 = vmin.xlane.f32.xlu0 %v1029
      %v1031 = vpop.xlane.xlu0 %1030
      %v1032 = vmin.f32 %v1015, %v1016
      %1033 = vmin.xlane.f32.xlu0 %v1032
      %v1034 = vpop.xlane.xlu0 %1033
      %v1035 = vmin.f32 %v1017, %v1018
      %1036 = vmin.xlane.f32.xlu0 %v1035
      %v1037 = vpop.xlane.xlu0 %1036
      %v1038 = vmin.f32 %v1019, %v1020
      %1039 = vmin.xlane.f32.xlu0 %v1038
      %v1040 = vpop.xlane.xlu0 %1039
      %v1041 = vmin.f32 %v1021, %v1022
      %1042 = vmin.xlane.f32.xlu0 %v1041
      %v1043 = vpop.xlane.xlu0 %1042
      %v1044 = vmin.f32 %v1023, %v1024
      %1045 = vmin.xlane.f32.xlu0 %v1044
      %v1046 = vpop.xlane.xlu0 %1045
      %v1047 = vmin.f32 %v1025, %v1026
      %1048 = vmin.xlane.f32.xlu0 %v1047
      %v1049 = vpop.xlane.xlu0 %1048
      %v1050 = vmin.f32 %v1027, %v1028
      %1051 = vmin.xlane.f32.xlu0 %v1050
      %v1052 = vpop.xlane.xlu0 %1051
      %vm1053 = vcmp.eq.f32.partialorder %v1013, %v1031
      %vm1054 = vcmp.eq.f32.partialorder %v1014, %v1031
      %vm1055 = vcmp.eq.f32.partialorder %v1015, %v1034
      %vm1056 = vcmp.eq.f32.partialorder %v1016, %v1034
      %vm1057 = vcmp.eq.f32.partialorder %v1017, %v1037
      %vm1058 = vcmp.eq.f32.partialorder %v1018, %v1037
      %vm1059 = vcmp.eq.f32.partialorder %v1019, %v1040
      %vm1060 = vcmp.eq.f32.partialorder %v1020, %v1040
      %vm1061 = vcmp.eq.f32.partialorder %v1021, %v1043
      %vm1062 = vcmp.eq.f32.partialorder %v1022, %v1043
      %vm1063 = vcmp.eq.f32.partialorder %v1023, %v1046
      %vm1064 = vcmp.eq.f32.partialorder %v1024, %v1046
      %vm1065 = vcmp.eq.f32.partialorder %v1025, %v1049
      %vm1066 = vcmp.eq.f32.partialorder %v1026, %v1049
      %vm1067 = vcmp.eq.f32.partialorder %v1027, %v1052
      %vm1068 = vcmp.eq.f32.partialorder %v1028, %v1052
      %v1069 = vsel %vm1053, %v509, 3e+38
      %v1070 = vsel %vm1054, %v500, 3e+38
      %v1071 = vsel %vm1055, %v510, 3e+38
      %v1072 = vsel %vm1056, %v500, 3e+38
      %v1073 = vsel %vm1057, %v511, 3e+38
      %v1074 = vsel %vm1058, %v500, 3e+38
      %v1075 = vsel %vm1059, %v512, 3e+38
      %v1076 = vsel %vm1060, %v500, 3e+38
      %v1077 = vsel %vm1061, %v513, 3e+38
      %v1078 = vsel %vm1062, %v500, 3e+38
      %v1079 = vsel %vm1063, %v514, 3e+38
      %v1080 = vsel %vm1064, %v500, 3e+38
      %v1081 = vsel %vm1065, %v515, 3e+38
      %v1082 = vsel %vm1066, %v500, 3e+38
      %v1083 = vsel %vm1067, %v516, 3e+38
      %v1084 = vsel %vm1068, %v500, 3e+38
      %v1085 = vmin.f32 %v1069, %v1070
      %1086 = vmin.xlane.f32.xlu0 %v1085
      %v1087 = vpop.xlane.xlu0 %1086
      %v1088 = vmin.f32 %v1071, %v1072
      %1089 = vmin.xlane.f32.xlu0 %v1088
      %v1090 = vpop.xlane.xlu0 %1089
      %v1091 = vmin.f32 %v1073, %v1074
      %1092 = vmin.xlane.f32.xlu0 %v1091
      %v1093 = vpop.xlane.xlu0 %1092
      %v1094 = vmin.f32 %v1075, %v1076
      %1095 = vmin.xlane.f32.xlu0 %v1094
      %v1096 = vpop.xlane.xlu0 %1095
      %v1097 = vmin.f32 %v1077, %v1078
      %1098 = vmin.xlane.f32.xlu0 %v1097
      %v1099 = vpop.xlane.xlu0 %1098
      %v1100 = vmin.f32 %v1079, %v1080
      %1101 = vmin.xlane.f32.xlu0 %v1100
      %v1102 = vpop.xlane.xlu0 %1101
      %v1103 = vmin.f32 %v1081, %v1082
      %1104 = vmin.xlane.f32.xlu0 %v1103
      %v1105 = vpop.xlane.xlu0 %1104
      %v1106 = vmin.f32 %v1083, %v1084
      %1107 = vmin.xlane.f32.xlu0 %v1106
      %v1108 = vpop.xlane.xlu0 %1107
      %vm1109 = vcmp.eq.f32.partialorder %v509, %v1087
      %vm1110 = vcmp.eq.f32.partialorder %v500, %v1087
      %vm1111 = vcmp.eq.f32.partialorder %v510, %v1090
      %vm1112 = vcmp.eq.f32.partialorder %v500, %v1090
      %vm1113 = vcmp.eq.f32.partialorder %v511, %v1093
      %vm1114 = vcmp.eq.f32.partialorder %v500, %v1093
      %vm1115 = vcmp.eq.f32.partialorder %v512, %v1096
      %vm1116 = vcmp.eq.f32.partialorder %v500, %v1096
      %vm1117 = vcmp.eq.f32.partialorder %v513, %v1099
      %vm1118 = vcmp.eq.f32.partialorder %v500, %v1099
      %vm1119 = vcmp.eq.f32.partialorder %v514, %v1102
      %vm1120 = vcmp.eq.f32.partialorder %v500, %v1102
      %vm1121 = vcmp.eq.f32.partialorder %v515, %v1105
      %vm1122 = vcmp.eq.f32.partialorder %v500, %v1105
      %vm1123 = vcmp.eq.f32.partialorder %v516, %v1108
      %vm1124 = vcmp.eq.f32.partialorder %v500, %v1108
      %vm1125 = vmand %vm1053, %vm1109
      %vm1126 = vmand %vm1054, %vm1110
      %vm1127 = vmand %vm1055, %vm1111
      %vm1128 = vmand %vm1056, %vm1112
      %vm1129 = vmand %vm1057, %vm1113
      %vm1130 = vmand %vm1058, %vm1114
      %vm1131 = vmand %vm1059, %vm1115
      %vm1132 = vmand %vm1060, %vm1116
      %vm1133 = vmand %vm1061, %vm1117
      %vm1134 = vmand %vm1062, %vm1118
      %vm1135 = vmand %vm1063, %vm1119
      %vm1136 = vmand %vm1064, %vm1120
      %vm1137 = vmand %vm1065, %vm1121
      %vm1138 = vmand %vm1066, %vm1122
      %vm1139 = vmand %vm1067, %vm1123
      %vm1140 = vmand %vm1068, %vm1124
      %v1141 = vsel %vm1125, inf, %v1013
      %v1142 = vsel %vm1126, inf, %v1014
      %v1143 = vsel %vm1127, inf, %v1015
      %v1144 = vsel %vm1128, inf, %v1016
      %v1145 = vsel %vm1129, inf, %v1017
      %v1146 = vsel %vm1130, inf, %v1018
      %v1147 = vsel %vm1131, inf, %v1019
      %v1148 = vsel %vm1132, inf, %v1020
      %v1149 = vsel %vm1133, inf, %v1021
      %v1150 = vsel %vm1134, inf, %v1022
      %v1151 = vsel %vm1135, inf, %v1023
      %v1152 = vsel %vm1136, inf, %v1024
      %v1153 = vsel %vm1137, inf, %v1025
      %v1154 = vsel %vm1138, inf, %v1026
      %v1155 = vsel %vm1139, inf, %v1027
      %v1156 = vsel %vm1140, inf, %v1028
      %v1157 = vmin.f32 %v1141, %v1142
      %1158 = vmin.xlane.f32.xlu0 %v1157
      %v1159 = vpop.xlane.xlu0 %1158
      %v1160 = vmin.f32 %v1143, %v1144
      %1161 = vmin.xlane.f32.xlu0 %v1160
      %v1162 = vpop.xlane.xlu0 %1161
      %v1163 = vmin.f32 %v1145, %v1146
      %1164 = vmin.xlane.f32.xlu0 %v1163
      %v1165 = vpop.xlane.xlu0 %1164
      %v1166 = vmin.f32 %v1147, %v1148
      %1167 = vmin.xlane.f32.xlu0 %v1166
      %v1168 = vpop.xlane.xlu0 %1167
      %v1169 = vmin.f32 %v1149, %v1150
      %1170 = vmin.xlane.f32.xlu0 %v1169
      %v1171 = vpop.xlane.xlu0 %1170
      %v1172 = vmin.f32 %v1151, %v1152
      %1173 = vmin.xlane.f32.xlu0 %v1172
      %v1174 = vpop.xlane.xlu0 %1173
      %v1175 = vmin.f32 %v1153, %v1154
      %1176 = vmin.xlane.f32.xlu0 %v1175
      %v1177 = vpop.xlane.xlu0 %1176
      %v1178 = vmin.f32 %v1155, %v1156
      %1179 = vmin.xlane.f32.xlu0 %v1178
      %v1180 = vpop.xlane.xlu0 %1179
      %vm1181 = vcmp.eq.f32.partialorder %v1141, %v1159
      %vm1182 = vcmp.eq.f32.partialorder %v1142, %v1159
      %vm1183 = vcmp.eq.f32.partialorder %v1143, %v1162
      %vm1184 = vcmp.eq.f32.partialorder %v1144, %v1162
      %vm1185 = vcmp.eq.f32.partialorder %v1145, %v1165
      %vm1186 = vcmp.eq.f32.partialorder %v1146, %v1165
      %vm1187 = vcmp.eq.f32.partialorder %v1147, %v1168
      %vm1188 = vcmp.eq.f32.partialorder %v1148, %v1168
      %vm1189 = vcmp.eq.f32.partialorder %v1149, %v1171
      %vm1190 = vcmp.eq.f32.partialorder %v1150, %v1171
      %vm1191 = vcmp.eq.f32.partialorder %v1151, %v1174
      %vm1192 = vcmp.eq.f32.partialorder %v1152, %v1174
      %vm1193 = vcmp.eq.f32.partialorder %v1153, %v1177
      %vm1194 = vcmp.eq.f32.partialorder %v1154, %v1177
      %vm1195 = vcmp.eq.f32.partialorder %v1155, %v1180
      %vm1196 = vcmp.eq.f32.partialorder %v1156, %v1180
      %v1197 = vsel %vm1181, %v509, 3e+38
      %v1198 = vsel %vm1182, %v500, 3e+38
      %v1199 = vsel %vm1183, %v510, 3e+38
      %v1200 = vsel %vm1184, %v500, 3e+38
      %v1201 = vsel %vm1185, %v511, 3e+38
      %v1202 = vsel %vm1186, %v500, 3e+38
      %v1203 = vsel %vm1187, %v512, 3e+38
      %v1204 = vsel %vm1188, %v500, 3e+38
      %v1205 = vsel %vm1189, %v513, 3e+38
      %v1206 = vsel %vm1190, %v500, 3e+38
      %v1207 = vsel %vm1191, %v514, 3e+38
      %v1208 = vsel %vm1192, %v500, 3e+38
      %v1209 = vsel %vm1193, %v515, 3e+38
      %v1210 = vsel %vm1194, %v500, 3e+38
      %v1211 = vsel %vm1195, %v516, 3e+38
      %v1212 = vsel %vm1196, %v500, 3e+38
      %v1213 = vmin.f32 %v1197, %v1198
      %1214 = vmin.xlane.f32.xlu0 %v1213
      %v1215 = vpop.xlane.xlu0 %1214
      %v1216 = vmin.f32 %v1199, %v1200
      %1217 = vmin.xlane.f32.xlu0 %v1216
      %v1218 = vpop.xlane.xlu0 %1217
      %v1219 = vmin.f32 %v1201, %v1202
      %1220 = vmin.xlane.f32.xlu0 %v1219
      %v1221 = vpop.xlane.xlu0 %1220
      %v1222 = vmin.f32 %v1203, %v1204
      %1223 = vmin.xlane.f32.xlu0 %v1222
      %v1224 = vpop.xlane.xlu0 %1223
      %v1225 = vmin.f32 %v1205, %v1206
      %1226 = vmin.xlane.f32.xlu0 %v1225
      %v1227 = vpop.xlane.xlu0 %1226
      %v1228 = vmin.f32 %v1207, %v1208
      %1229 = vmin.xlane.f32.xlu0 %v1228
      %v1230 = vpop.xlane.xlu0 %1229
      %v1231 = vmin.f32 %v1209, %v1210
      %1232 = vmin.xlane.f32.xlu0 %v1231
      %v1233 = vpop.xlane.xlu0 %1232
      %v1234 = vmin.f32 %v1211, %v1212
      %1235 = vmin.xlane.f32.xlu0 %v1234
      %v1236 = vpop.xlane.xlu0 %1235
      %vm1237 = vcmp.eq.f32.partialorder %v509, %v1215
      %vm1238 = vcmp.eq.f32.partialorder %v500, %v1215
      %vm1239 = vcmp.eq.f32.partialorder %v510, %v1218
      %vm1240 = vcmp.eq.f32.partialorder %v500, %v1218
      %vm1241 = vcmp.eq.f32.partialorder %v511, %v1221
      %vm1242 = vcmp.eq.f32.partialorder %v500, %v1221
      %vm1243 = vcmp.eq.f32.partialorder %v512, %v1224
      %vm1244 = vcmp.eq.f32.partialorder %v500, %v1224
      %vm1245 = vcmp.eq.f32.partialorder %v513, %v1227
      %vm1246 = vcmp.eq.f32.partialorder %v500, %v1227
      %vm1247 = vcmp.eq.f32.partialorder %v514, %v1230
      %vm1248 = vcmp.eq.f32.partialorder %v500, %v1230
      %vm1249 = vcmp.eq.f32.partialorder %v515, %v1233
      %vm1250 = vcmp.eq.f32.partialorder %v500, %v1233
      %vm1251 = vcmp.eq.f32.partialorder %v516, %v1236
      %vm1252 = vcmp.eq.f32.partialorder %v500, %v1236
      %vm1253 = vmand %vm1181, %vm1237
      %vm1254 = vmand %vm1182, %vm1238
      %vm1255 = vmand %vm1183, %vm1239
      %vm1256 = vmand %vm1184, %vm1240
      %vm1257 = vmand %vm1185, %vm1241
      %vm1258 = vmand %vm1186, %vm1242
      %vm1259 = vmand %vm1187, %vm1243
      %vm1260 = vmand %vm1188, %vm1244
      %vm1261 = vmand %vm1189, %vm1245
      %vm1262 = vmand %vm1190, %vm1246
      %vm1263 = vmand %vm1191, %vm1247
      %vm1264 = vmand %vm1192, %vm1248
      %vm1265 = vmand %vm1193, %vm1249
      %vm1266 = vmand %vm1194, %vm1250
      %vm1267 = vmand %vm1195, %vm1251
      %vm1268 = vmand %vm1196, %vm1252
      %v1269 = vsel %vm1253, inf, %v1141
      %v1270 = vsel %vm1254, inf, %v1142
      %v1271 = vsel %vm1255, inf, %v1143
      %v1272 = vsel %vm1256, inf, %v1144
      %v1273 = vsel %vm1257, inf, %v1145
      %v1274 = vsel %vm1258, inf, %v1146
      %v1275 = vsel %vm1259, inf, %v1147
      %v1276 = vsel %vm1260, inf, %v1148
      %v1277 = vsel %vm1261, inf, %v1149
      %v1278 = vsel %vm1262, inf, %v1150
      %v1279 = vsel %vm1263, inf, %v1151
      %v1280 = vsel %vm1264, inf, %v1152
      %v1281 = vsel %vm1265, inf, %v1153
      %v1282 = vsel %vm1266, inf, %v1154
      %v1283 = vsel %vm1267, inf, %v1155
      %v1284 = vsel %vm1268, inf, %v1156
      %v1285 = vmin.f32 %v1269, %v1270
      %1286 = vmin.xlane.f32.xlu0 %v1285
      %v1287 = vpop.xlane.xlu0 %1286
      %v1288 = vmin.f32 %v1271, %v1272
      %1289 = vmin.xlane.f32.xlu0 %v1288
      %v1290 = vpop.xlane.xlu0 %1289
      %v1291 = vmin.f32 %v1273, %v1274
      %1292 = vmin.xlane.f32.xlu0 %v1291
      %v1293 = vpop.xlane.xlu0 %1292
      %v1294 = vmin.f32 %v1275, %v1276
      %1295 = vmin.xlane.f32.xlu0 %v1294
      %v1296 = vpop.xlane.xlu0 %1295
      %v1297 = vmin.f32 %v1277, %v1278
      %1298 = vmin.xlane.f32.xlu0 %v1297
      %v1299 = vpop.xlane.xlu0 %1298
      %v1300 = vmin.f32 %v1279, %v1280
      %1301 = vmin.xlane.f32.xlu0 %v1300
      %v1302 = vpop.xlane.xlu0 %1301
      %v1303 = vmin.f32 %v1281, %v1282
      %1304 = vmin.xlane.f32.xlu0 %v1303
      %v1305 = vpop.xlane.xlu0 %1304
      %v1306 = vmin.f32 %v1283, %v1284
      %1307 = vmin.xlane.f32.xlu0 %v1306
      %v1308 = vpop.xlane.xlu0 %1307
      %vm1309 = vcmp.eq.f32.partialorder %v1269, %v1287
      %vm1310 = vcmp.eq.f32.partialorder %v1270, %v1287
      %vm1311 = vcmp.eq.f32.partialorder %v1271, %v1290
      %vm1312 = vcmp.eq.f32.partialorder %v1272, %v1290
      %vm1313 = vcmp.eq.f32.partialorder %v1273, %v1293
      %vm1314 = vcmp.eq.f32.partialorder %v1274, %v1293
      %vm1315 = vcmp.eq.f32.partialorder %v1275, %v1296
      %vm1316 = vcmp.eq.f32.partialorder %v1276, %v1296
      %vm1317 = vcmp.eq.f32.partialorder %v1277, %v1299
      %vm1318 = vcmp.eq.f32.partialorder %v1278, %v1299
      %vm1319 = vcmp.eq.f32.partialorder %v1279, %v1302
      %vm1320 = vcmp.eq.f32.partialorder %v1280, %v1302
      %vm1321 = vcmp.eq.f32.partialorder %v1281, %v1305
      %vm1322 = vcmp.eq.f32.partialorder %v1282, %v1305
      %vm1323 = vcmp.eq.f32.partialorder %v1283, %v1308
      %vm1324 = vcmp.eq.f32.partialorder %v1284, %v1308
      %v1325 = vsel %vm1309, %v509, 3e+38
      %v1326 = vsel %vm1310, %v500, 3e+38
      %v1327 = vsel %vm1311, %v510, 3e+38
      %v1328 = vsel %vm1312, %v500, 3e+38
      %v1329 = vsel %vm1313, %v511, 3e+38
      %v1330 = vsel %vm1314, %v500, 3e+38
      %v1331 = vsel %vm1315, %v512, 3e+38
      %v1332 = vsel %vm1316, %v500, 3e+38
      %v1333 = vsel %vm1317, %v513, 3e+38
      %v1334 = vsel %vm1318, %v500, 3e+38
      %v1335 = vsel %vm1319, %v514, 3e+38
      %v1336 = vsel %vm1320, %v500, 3e+38
      %v1337 = vsel %vm1321, %v515, 3e+38
      %v1338 = vsel %vm1322, %v500, 3e+38
      %v1339 = vsel %vm1323, %v516, 3e+38
      %v1340 = vsel %vm1324, %v500, 3e+38
      %v1341 = vmin.f32 %v1325, %v1326
      %1342 = vmin.xlane.f32.xlu0 %v1341
      %v1343 = vpop.xlane.xlu0 %1342
      %v1344 = vmin.f32 %v1327, %v1328
      %1345 = vmin.xlane.f32.xlu0 %v1344
      %v1346 = vpop.xlane.xlu0 %1345
      %v1347 = vmin.f32 %v1329, %v1330
      %1348 = vmin.xlane.f32.xlu0 %v1347
      %v1349 = vpop.xlane.xlu0 %1348
      %v1350 = vmin.f32 %v1331, %v1332
      %1351 = vmin.xlane.f32.xlu0 %v1350
      %v1352 = vpop.xlane.xlu0 %1351
      %v1353 = vmin.f32 %v1333, %v1334
      %1354 = vmin.xlane.f32.xlu0 %v1353
      %v1355 = vpop.xlane.xlu0 %1354
      %v1356 = vmin.f32 %v1335, %v1336
      %1357 = vmin.xlane.f32.xlu0 %v1356
      %v1358 = vpop.xlane.xlu0 %1357
      %v1359 = vmin.f32 %v1337, %v1338
      %1360 = vmin.xlane.f32.xlu0 %v1359
      %v1361 = vpop.xlane.xlu0 %1360
      %v1362 = vmin.f32 %v1339, %v1340
      %1363 = vmin.xlane.f32.xlu0 %v1362
      %v1364 = vpop.xlane.xlu0 %1363
      %vm1365 = vcmp.eq.f32.partialorder %v509, %v1343
      %vm1366 = vcmp.eq.f32.partialorder %v500, %v1343
      %vm1367 = vcmp.eq.f32.partialorder %v510, %v1346
      %vm1368 = vcmp.eq.f32.partialorder %v500, %v1346
      %vm1369 = vcmp.eq.f32.partialorder %v511, %v1349
      %vm1370 = vcmp.eq.f32.partialorder %v500, %v1349
      %vm1371 = vcmp.eq.f32.partialorder %v512, %v1352
      %vm1372 = vcmp.eq.f32.partialorder %v500, %v1352
      %vm1373 = vcmp.eq.f32.partialorder %v513, %v1355
      %vm1374 = vcmp.eq.f32.partialorder %v500, %v1355
      %vm1375 = vcmp.eq.f32.partialorder %v514, %v1358
      %vm1376 = vcmp.eq.f32.partialorder %v500, %v1358
      %vm1377 = vcmp.eq.f32.partialorder %v515, %v1361
      %vm1378 = vcmp.eq.f32.partialorder %v500, %v1361
      %vm1379 = vcmp.eq.f32.partialorder %v516, %v1364
      %vm1380 = vcmp.eq.f32.partialorder %v500, %v1364
      %vm1381 = vmand %vm1309, %vm1365
      %vm1382 = vmand %vm1310, %vm1366
      %vm1383 = vmand %vm1311, %vm1367
      %vm1384 = vmand %vm1312, %vm1368
      %vm1385 = vmand %vm1313, %vm1369
      %vm1386 = vmand %vm1314, %vm1370
      %vm1387 = vmand %vm1315, %vm1371
      %vm1388 = vmand %vm1316, %vm1372
      %vm1389 = vmand %vm1317, %vm1373
      %vm1390 = vmand %vm1318, %vm1374
      %vm1391 = vmand %vm1319, %vm1375
      %vm1392 = vmand %vm1320, %vm1376
      %vm1393 = vmand %vm1321, %vm1377
      %vm1394 = vmand %vm1322, %vm1378
      %vm1395 = vmand %vm1323, %vm1379
      %vm1396 = vmand %vm1324, %vm1380
      %v1397 = vsel %vm1381, inf, %v1269
      %v1398 = vsel %vm1382, inf, %v1270
      %v1399 = vsel %vm1383, inf, %v1271
      %v1400 = vsel %vm1384, inf, %v1272
      %v1401 = vsel %vm1385, inf, %v1273
      %v1402 = vsel %vm1386, inf, %v1274
      %v1403 = vsel %vm1387, inf, %v1275
      %v1404 = vsel %vm1388, inf, %v1276
      %v1405 = vsel %vm1389, inf, %v1277
      %v1406 = vsel %vm1390, inf, %v1278
      %v1407 = vsel %vm1391, inf, %v1279
      %v1408 = vsel %vm1392, inf, %v1280
      %v1409 = vsel %vm1393, inf, %v1281
      %v1410 = vsel %vm1394, inf, %v1282
      %v1411 = vsel %vm1395, inf, %v1283
      %v1412 = vsel %vm1396, inf, %v1284
      %v1413 = vmin.f32 %v1397, %v1398
      %1414 = vmin.xlane.f32.xlu0 %v1413
      %v1415 = vpop.xlane.xlu0 %1414
      %v1416 = vmin.f32 %v1399, %v1400
      %1417 = vmin.xlane.f32.xlu0 %v1416
      %v1418 = vpop.xlane.xlu0 %1417
      %v1419 = vmin.f32 %v1401, %v1402
      %1420 = vmin.xlane.f32.xlu0 %v1419
      %v1421 = vpop.xlane.xlu0 %1420
      %v1422 = vmin.f32 %v1403, %v1404
      %1423 = vmin.xlane.f32.xlu0 %v1422
      %v1424 = vpop.xlane.xlu0 %1423
      %v1425 = vmin.f32 %v1405, %v1406
      %1426 = vmin.xlane.f32.xlu0 %v1425
      %v1427 = vpop.xlane.xlu0 %1426
      %v1428 = vmin.f32 %v1407, %v1408
      %1429 = vmin.xlane.f32.xlu0 %v1428
      %v1430 = vpop.xlane.xlu0 %1429
      %v1431 = vmin.f32 %v1409, %v1410
      %1432 = vmin.xlane.f32.xlu0 %v1431
      %v1433 = vpop.xlane.xlu0 %1432
      %v1434 = vmin.f32 %v1411, %v1412
      %1435 = vmin.xlane.f32.xlu0 %v1434
      %v1436 = vpop.xlane.xlu0 %1435
      %vm1437 = vcmp.eq.f32.partialorder %v1397, %v1415
      %vm1438 = vcmp.eq.f32.partialorder %v1398, %v1415
      %vm1439 = vcmp.eq.f32.partialorder %v1399, %v1418
      %vm1440 = vcmp.eq.f32.partialorder %v1400, %v1418
      %vm1441 = vcmp.eq.f32.partialorder %v1401, %v1421
      %vm1442 = vcmp.eq.f32.partialorder %v1402, %v1421
      %vm1443 = vcmp.eq.f32.partialorder %v1403, %v1424
      %vm1444 = vcmp.eq.f32.partialorder %v1404, %v1424
      %vm1445 = vcmp.eq.f32.partialorder %v1405, %v1427
      %vm1446 = vcmp.eq.f32.partialorder %v1406, %v1427
      %vm1447 = vcmp.eq.f32.partialorder %v1407, %v1430
      %vm1448 = vcmp.eq.f32.partialorder %v1408, %v1430
      %vm1449 = vcmp.eq.f32.partialorder %v1409, %v1433
      %vm1450 = vcmp.eq.f32.partialorder %v1410, %v1433
      %vm1451 = vcmp.eq.f32.partialorder %v1411, %v1436
      %vm1452 = vcmp.eq.f32.partialorder %v1412, %v1436
      %v1453 = vsel %vm1437, %v509, 3e+38
      %v1454 = vsel %vm1438, %v500, 3e+38
      %v1455 = vsel %vm1439, %v510, 3e+38
      %v1456 = vsel %vm1440, %v500, 3e+38
      %v1457 = vsel %vm1441, %v511, 3e+38
      %v1458 = vsel %vm1442, %v500, 3e+38
      %v1459 = vsel %vm1443, %v512, 3e+38
      %v1460 = vsel %vm1444, %v500, 3e+38
      %v1461 = vsel %vm1445, %v513, 3e+38
      %v1462 = vsel %vm1446, %v500, 3e+38
      %v1463 = vsel %vm1447, %v514, 3e+38
      %v1464 = vsel %vm1448, %v500, 3e+38
      %v1465 = vsel %vm1449, %v515, 3e+38
      %v1466 = vsel %vm1450, %v500, 3e+38
      %v1467 = vsel %vm1451, %v516, 3e+38
      %v1468 = vsel %vm1452, %v500, 3e+38
      %v1469 = vmin.f32 %v1453, %v1454
      %1470 = vmin.xlane.f32.xlu0 %v1469
      %v1471 = vpop.xlane.xlu0 %1470
      %v1472 = vmin.f32 %v1455, %v1456
      %1473 = vmin.xlane.f32.xlu0 %v1472
      %v1474 = vpop.xlane.xlu0 %1473
      %v1475 = vmin.f32 %v1457, %v1458
      %1476 = vmin.xlane.f32.xlu0 %v1475
      %v1477 = vpop.xlane.xlu0 %1476
      %v1478 = vmin.f32 %v1459, %v1460
      %1479 = vmin.xlane.f32.xlu0 %v1478
      %v1480 = vpop.xlane.xlu0 %1479
      %v1481 = vmin.f32 %v1461, %v1462
      %1482 = vmin.xlane.f32.xlu0 %v1481
      %v1483 = vpop.xlane.xlu0 %1482
      %v1484 = vmin.f32 %v1463, %v1464
      %1485 = vmin.xlane.f32.xlu0 %v1484
      %v1486 = vpop.xlane.xlu0 %1485
      %v1487 = vmin.f32 %v1465, %v1466
      %1488 = vmin.xlane.f32.xlu0 %v1487
      %v1489 = vpop.xlane.xlu0 %1488
      %v1490 = vmin.f32 %v1467, %v1468
      %1491 = vmin.xlane.f32.xlu0 %v1490
      %v1492 = vpop.xlane.xlu0 %1491
      %vm1493 = vcmask 7168
      %v1494 = vsel %vm1493, %v519, %v647
      %v1495 = vsel %vm1493, %v522, %v650
      %v1496 = vsel %vm1493, %v525, %v653
      %v1497 = vsel %vm1493, %v528, %v656
      %v1498 = vsel %vm1493, %v531, %v659
      %v1499 = vsel %vm1493, %v534, %v662
      %v1500 = vsel %vm1493, %v537, %v665
      %v1501 = vsel %vm1493, %v540, %v668
      %vm1502 = vcmask 15360
      %v1503 = vsel %vm1502, %v1494, %v775
      %v1504 = vsel %vm1502, %v1495, %v778
      %v1505 = vsel %vm1502, %v1496, %v781
      %v1506 = vsel %vm1502, %v1497, %v784
      %v1507 = vsel %vm1502, %v1498, %v787
      %v1508 = vsel %vm1502, %v1499, %v790
      %v1509 = vsel %vm1502, %v1500, %v793
      %v1510 = vsel %vm1502, %v1501, %v796
      %vm1511 = vcmask 23552
      %v1512 = vsel %vm1511, %v1503, %v903
      %v1513 = vsel %vm1511, %v1504, %v906
      %v1514 = vsel %vm1511, %v1505, %v909
      %v1515 = vsel %vm1511, %v1506, %v912
      %v1516 = vsel %vm1511, %v1507, %v915
      %v1517 = vsel %vm1511, %v1508, %v918
      %v1518 = vsel %vm1511, %v1509, %v921
      %v1519 = vsel %vm1511, %v1510, %v924
      %vm1520 = vcmask 31744
      %v1521 = vsel %vm1520, %v1512, %v1031
      %v1522 = vsel %vm1520, %v1513, %v1034
      %v1523 = vsel %vm1520, %v1514, %v1037
      %v1524 = vsel %vm1520, %v1515, %v1040
      %v1525 = vsel %vm1520, %v1516, %v1043
      %v1526 = vsel %vm1520, %v1517, %v1046
      %v1527 = vsel %vm1520, %v1518, %v1049
      %v1528 = vsel %vm1520, %v1519, %v1052
      %vm1529 = vcmask 39936
      %v1530 = vsel %vm1529, %v1521, %v1159
      %v1531 = vsel %vm1529, %v1522, %v1162
      %v1532 = vsel %vm1529, %v1523, %v1165
      %v1533 = vsel %vm1529, %v1524, %v1168
      %v1534 = vsel %vm1529, %v1525, %v1171
      %v1535 = vsel %vm1529, %v1526, %v1174
      %v1536 = vsel %vm1529, %v1527, %v1177
      %v1537 = vsel %vm1529, %v1528, %v1180
      %vm1538 = vcmask 48128
      %v1539 = vsel %vm1538, %v1530, %v1287
      %v1540 = vsel %vm1538, %v1531, %v1290
      %v1541 = vsel %vm1538, %v1532, %v1293
      %v1542 = vsel %vm1538, %v1533, %v1296
      %v1543 = vsel %vm1538, %v1534, %v1299
      %v1544 = vsel %vm1538, %v1535, %v1302
      %v1545 = vsel %vm1538, %v1536, %v1305
      %v1546 = vsel %vm1538, %v1537, %v1308
      %vm1547 = vcmask 56320
      %v1548 = vsel %vm1547, %v1539, %v1415
      %v1549 = vsel %vm1547, %v1540, %v1418
      %v1550 = vsel %vm1547, %v1541, %v1421
      %v1551 = vsel %vm1547, %v1542, %v1424
      %v1552 = vsel %vm1547, %v1543, %v1427
      %v1553 = vsel %vm1547, %v1544, %v1430
      %v1554 = vsel %vm1547, %v1545, %v1433
      %v1555 = vsel %vm1547, %v1546, %v1436
      %vm1556 = vcmask 64512
      %1557 = vst.msk [vmem:[#allocation2] sm:$0xff] %vm1556, %v1548
      %1558 = vst.msk [vmem:[#allocation2 + $0x8] sm:$0xff] %vm1556, %v1549
      %1559 = vst.msk [vmem:[#allocation2 + $0x10] sm:$0xff] %vm1556, %v1550
      %1560 = vst.msk [vmem:[#allocation2 + $0x18] sm:$0xff] %vm1556, %v1551
      %1561 = vst.msk [vmem:[#allocation2 + $0x20] sm:$0xff] %vm1556, %v1552
      %1562 = vst.msk [vmem:[#allocation2 + $0x28] sm:$0xff] %vm1556, %v1553
      %1563 = vst.msk [vmem:[#allocation2 + $0x30] sm:$0xff] %vm1556, %v1554
      %1564 = vst.msk [vmem:[#allocation2 + $0x38] sm:$0xff] %vm1556, %v1555
      %v1565 = vsel %vm1493, %v575, %v703
      %v1566 = vsel %vm1493, %v578, %v706
      %v1567 = vsel %vm1493, %v581, %v709
      %v1568 = vsel %vm1493, %v584, %v712
      %v1569 = vsel %vm1493, %v587, %v715
      %v1570 = vsel %vm1493, %v590, %v718
      %v1571 = vsel %vm1493, %v593, %v721
      %v1572 = vsel %vm1493, %v596, %v724
      %v1573 = vsel %vm1502, %v1565, %v831
      %v1574 = vsel %vm1502, %v1566, %v834
      %v1575 = vsel %vm1502, %v1567, %v837
      %v1576 = vsel %vm1502, %v1568, %v840
      %v1577 = vsel %vm1502, %v1569, %v843
      %v1578 = vsel %vm1502, %v1570, %v846
      %v1579 = vsel %vm1502, %v1571, %v849
      %v1580 = vsel %vm1502, %v1572, %v852
      %v1581 = vsel %vm1511, %v1573, %v959
      %v1582 = vsel %vm1511, %v1574, %v962
      %v1583 = vsel %vm1511, %v1575, %v965
      %v1584 = vsel %vm1511, %v1576, %v968
      %v1585 = vsel %vm1511, %v1577, %v971
      %v1586 = vsel %vm1511, %v1578, %v974
      %v1587 = vsel %vm1511, %v1579, %v977
      %v1588 = vsel %vm1511, %v1580, %v980
      %v1589 = vsel %vm1520, %v1581, %v1087
      %v1590 = vsel %vm1520, %v1582, %v1090
      %v1591 = vsel %vm1520, %v1583, %v1093
      %v1592 = vsel %vm1520, %v1584, %v1096
      %v1593 = vsel %vm1520, %v1585, %v1099
      %v1594 = vsel %vm1520, %v1586, %v1102
      %v1595 = vsel %vm1520, %v1587, %v1105
      %v1596 = vsel %vm1520, %v1588, %v1108
      %v1597 = vsel %vm1529, %v1589, %v1215
      %v1598 = vsel %vm1529, %v1590, %v1218
      %v1599 = vsel %vm1529, %v1591, %v1221
      %v1600 = vsel %vm1529, %v1592, %v1224
      %v1601 = vsel %vm1529, %v1593, %v1227
      %v1602 = vsel %vm1529, %v1594, %v1230
      %v1603 = vsel %vm1529, %v1595, %v1233
      %v1604 = vsel %vm1529, %v1596, %v1236
      %v1605 = vsel %vm1538, %v1597, %v1343
      %v1606 = vsel %vm1538, %v1598, %v1346
      %v1607 = vsel %vm1538, %v1599, %v1349
      %v1608 = vsel %vm1538, %v1600, %v1352
      %v1609 = vsel %vm1538, %v1601, %v1355
      %v1610 = vsel %vm1538, %v1602, %v1358
      %v1611 = vsel %vm1538, %v1603, %v1361
      %v1612 = vsel %vm1538, %v1604, %v1364
      %v1613 = vsel %vm1547, %v1605, %v1471
      %v1614 = vsel %vm1547, %v1606, %v1474
      %v1615 = vsel %vm1547, %v1607, %v1477
      %v1616 = vsel %vm1547, %v1608, %v1480
      %v1617 = vsel %vm1547, %v1609, %v1483
      %v1618 = vsel %vm1547, %v1610, %v1486
      %v1619 = vsel %vm1547, %v1611, %v1489
      %v1620 = vsel %vm1547, %v1612, %v1492
      %1621 = vst.msk [vmem:[#allocation3] sm:$0xff] %vm1556, %v1613
      %1622 = vst.msk [vmem:[#allocation3 + $0x8] sm:$0xff] %vm1556, %v1614
      %1623 = vst.msk [vmem:[#allocation3 + $0x10] sm:$0xff] %vm1556, %v1615
      %1624 = vst.msk [vmem:[#allocation3 + $0x18] sm:$0xff] %vm1556, %v1616
      %1625 = vst.msk [vmem:[#allocation3 + $0x20] sm:$0xff] %vm1556, %v1617
      %1626 = vst.msk [vmem:[#allocation3 + $0x28] sm:$0xff] %vm1556, %v1618
      %1627 = vst.msk [vmem:[#allocation3 + $0x30] sm:$0xff] %vm1556, %v1619
      %1628 = vst.msk [vmem:[#allocation3 + $0x38] sm:$0xff] %vm1556, %v1620
      // Predicated region
      $region33: #{tpu_custom_call.1} parent=27 // pred_check
        %p1629 = pneg %p269
      $region34: #{tpu_custom_call.1} parent=27 // pred_check_branch
        %1631 = sbr.rel (%p1629) target = $region36
      $region35: #{tpu_custom_call.1} parent=27 // pred_region
        %v1632 = vld [vmem:[#allocation2] sm:$0xff]
        %v1633 = vld [vmem:[#allocation2 + $0x8] sm:$0xff]
        %v1634 = vld [vmem:[#allocation2 + $0x10] sm:$0xff]
        %v1635 = vld [vmem:[#allocation2 + $0x18] sm:$0xff]
        %v1636 = vld [vmem:[#allocation2 + $0x20] sm:$0xff]
        %v1637 = vld [vmem:[#allocation2 + $0x28] sm:$0xff]
        %v1638 = vld [vmem:[#allocation2 + $0x30] sm:$0xff]
        %v1639 = vld [vmem:[#allocation2 + $0x38] sm:$0xff]
        %1640 = vst.msk [vmem:[%s257] sm:$0xff] %vm1556, %v1632
        %1641 = vst.msk [vmem:[%s257 + $0x8] sm:$0xff] %vm1556, %v1633
        %1642 = vst.msk [vmem:[%s257 + $0x10] sm:$0xff] %vm1556, %v1634
        %1643 = vst.msk [vmem:[%s257 + $0x18] sm:$0xff] %vm1556, %v1635
        %1644 = vst.msk [vmem:[%s257 + $0x20] sm:$0xff] %vm1556, %v1636
        %1645 = vst.msk [vmem:[%s257 + $0x28] sm:$0xff] %vm1556, %v1637
        %1646 = vst.msk [vmem:[%s257 + $0x30] sm:$0xff] %vm1556, %v1638
        %1647 = vst.msk [vmem:[%s257 + $0x38] sm:$0xff] %vm1556, %v1639
        %v1648 = vld [vmem:[#allocation3] sm:$0xff]
        %v1649 = vld [vmem:[#allocation3 + $0x8] sm:$0xff]
        %v1650 = vld [vmem:[#allocation3 + $0x10] sm:$0xff]
        %v1651 = vld [vmem:[#allocation3 + $0x18] sm:$0xff]
        %v1652 = vld [vmem:[#allocation3 + $0x20] sm:$0xff]
        %v1653 = vld [vmem:[#allocation3 + $0x28] sm:$0xff]
        %v1654 = vld [vmem:[#allocation3 + $0x30] sm:$0xff]
        %v1655 = vld [vmem:[#allocation3 + $0x38] sm:$0xff]
        %v1656 = vcvt.f32.s32.to.zero.pseudo %v1648
        %v1657 = vcvt.f32.s32.to.zero.pseudo %v1649
        %v1658 = vcvt.f32.s32.to.zero.pseudo %v1650
        %v1659 = vcvt.f32.s32.to.zero.pseudo %v1651
        %v1660 = vcvt.f32.s32.to.zero.pseudo %v1652
        %v1661 = vcvt.f32.s32.to.zero.pseudo %v1653
        %v1662 = vcvt.f32.s32.to.zero.pseudo %v1654
        %v1663 = vcvt.f32.s32.to.zero.pseudo %v1655
        %1664 = vst.msk [vmem:[%s267] sm:$0xff] %vm1556, %v1656
        %1665 = vst.msk [vmem:[%s267 + $0x8] sm:$0xff] %vm1556, %v1657
        %1666 = vst.msk [vmem:[%s267 + $0x10] sm:$0xff] %vm1556, %v1658
        %1667 = vst.msk [vmem:[%s267 + $0x18] sm:$0xff] %vm1556, %v1659
        %1668 = vst.msk [vmem:[%s267 + $0x20] sm:$0xff] %vm1556, %v1660
        %1669 = vst.msk [vmem:[%s267 + $0x28] sm:$0xff] %vm1556, %v1661
        %1670 = vst.msk [vmem:[%s267 + $0x30] sm:$0xff] %vm1556, %v1662
        %1671 = vst.msk [vmem:[%s267 + $0x38] sm:$0xff] %vm1556, %v1663
      $region36: #{tpu_custom_call.1} parent=27 // pred_fallthru
        _
      %s1672 = smul.u32 8, %s21
      %p1673 = scmp.lt.s32.totalorder %s20, 1
      %s1674 = scalar_select %p1673, %s20, 1
      %p1675 = scmp.lt.s32.totalorder %s1672, 7
      %s1676 = scalar_select %p1675, %s1672, 7
      %s1677 = smul.addr %s1674, 8
      %s1678 = sadd.s32 %s1676, %s1677
      %s1679 = smul.addr %s1678, 8
      %s1680 = scalar_lea.vmem %s2, %s1679
      %s1681 = smul.u32 8, %s21
      %p1682 = scmp.lt.s32.totalorder %s20, 1
      %s1683 = scalar_select %p1682, %s20, 1
      %p1684 = scmp.lt.s32.totalorder %s1681, 7
      %s1685 = scalar_select %p1684, %s1681, 7
      %s1686 = smul.addr %s1683, 8
      %s1687 = sadd.s32 %s1685, %s1686
      %s1688 = smul.addr %s1687, 8
      %s1689 = scalar_lea.vmem %s3, %s1688
      // Predicated region
      $region37: #{tpu_custom_call.1} parent=27 // pred_check
        %p1690 = pneg %p110
      $region38: #{tpu_custom_call.1} parent=27 // pred_check_branch
        %1692 = sbr.rel (%p1690) target = $region40
      $region39: #{tpu_custom_call.1} parent=27 // pred_region
        %s1693 = smul.u32 8, %s21
      $region40: #{tpu_custom_call.1} parent=27 // pred_fallthru
        _
      // Predicated region
      $region41: #{tpu_custom_call.1} parent=27 // pred_check
        %p1694 = pneg %p138
      $region42: #{tpu_custom_call.1} parent=27 // pred_check_branch
        %1696 = sbr.rel (%p1694) target = $region44
      $region43: #{tpu_custom_call.1} parent=27 // pred_region
        %s1697 = smul.u32 8, %s21
      $region44: #{tpu_custom_call.1} parent=27 // pred_fallthru
        _
    $region28: #{tpu_custom_call.1} parent=5 // pred_fallthru
      _
    %p1698 = scmp.le.s32.totalorder 2, %s10
    // Predicated region
    $region45: #{tpu_custom_call.1} parent=5 // pred_check
      %p1699 = pneg %p1698
    $region46: #{tpu_custom_call.1} parent=5 // pred_check_branch
      %1701 = sbr.rel (%p1699) target = $region48
    $region47: #{tpu_custom_call.1} parent=5 // pred_region
      %s1702 = ssub.s32 %s10, 2
      // Predicated region
      $region49: #{tpu_custom_call.1} parent=47 // pred_check
        %p1703 = pneg %p116
      $region50: #{tpu_custom_call.1} parent=47 // pred_check_branch
        %1705 = sbr.rel (%p1703) target = $region52
      $region51: #{tpu_custom_call.1} parent=47 // pred_region
        %s1706 = smul.u32 8, %s24
        %p1707 = scmp.lt.s32.totalorder %s23, 1
        %s1708 = scalar_select %p1707, %s23, 1
        %p1709 = scmp.lt.s32.totalorder %s1706, 7
        %s1710 = scalar_select %p1709, %s1706, 7
        %s1711 = smul.addr %s1708, 8
        %s1712 = sadd.s32 %s1710, %s1711
        %s1713 = smul.addr %s1712, 8
        %s1714 = scalar_lea.vmem %s2, %s1713
      $region52: #{tpu_custom_call.1} parent=47 // pred_fallthru
        _
      // Predicated region
      $region53: #{tpu_custom_call.1} parent=47 // pred_check
        %p1715 = pneg %p144
      $region54: #{tpu_custom_call.1} parent=47 // pred_check_branch
        %1717 = sbr.rel (%p1715) target = $region56
      $region55: #{tpu_custom_call.1} parent=47 // pred_region
        %s1718 = smul.u32 8, %s24
        %p1719 = scmp.lt.s32.totalorder %s23, 1
        %s1720 = scalar_select %p1719, %s23, 1
        %p1721 = scmp.lt.s32.totalorder %s1718, 7
        %s1722 = scalar_select %p1721, %s1718, 7
        %s1723 = smul.addr %s1720, 8
        %s1724 = sadd.s32 %s1722, %s1723
        %s1725 = smul.addr %s1724, 8
        %s1726 = scalar_lea.vmem %s3, %s1725
      $region56: #{tpu_custom_call.1} parent=47 // pred_fallthru
        _
    $region48: #{tpu_custom_call.1} parent=5 // pred_fallthru
      _
  $region6: #{tpu_custom_call.1} parent=0 // loop_footer
    %s14 = sadd.s32 1, %s10
  $region7: #{tpu_custom_call.1} parent=0 // loop_footer_branch
    %9 = sbr.rel target = $region3
  $region8: #{tpu_custom_call.1} parent=0 // loop_exit
    _

</llo_original>
